<compile_context>
chip_gen: v7x
topology: tpu7x:2x2x1
jax: 0.10.0
libtpu: 0.0.40
codegen_flags: <defaults>
</compile_context>

<pallas_src>
import jax
import jax.numpy as jnp
from jax.experimental import pallas as pl
from jax.experimental.pallas import tpu as pltpu


# ----------------------------- fused Pallas kernel --------------------------

def _make_fused_lstm_kernel(T, B, H, num_layers):
    """Build the fused kernel for a fixed (T, B, H, num_layers) configuration.

    Ref layout (all whole-array, VMEM-resident):
      refs[0]                        : x, (T*B, D) time-major, row = t*B + b
      refs[1+3*l], refs[2+3*l], refs[3+3*l]
                                     : layer l  w_ih_t (d_in,4H), w_hh_t (H,4H), b (1,4H)
      refs[1+3*L], refs[2+3*L]       : fc  w_t (H,OUT), b (1,OUT)
      refs[3+3*L]                    : out_ref, (B, OUT)
    """

    def kernel(*refs):
        x_ref = refs[0]
        fc_w_ref = refs[1 + 3 * num_layers]
        fc_b_ref = refs[2 + 3 * num_layers]
        out_ref = refs[3 + 3 * num_layers]

        cur = x_ref[...].astype(jnp.float32)          # (T*B, d_in)
        h = None
        for l in range(num_layers):
            w_ih = refs[1 + 3 * l][...]               # (d_in, 4H)
            w_hh = refs[2 + 3 * l][...]               # (H, 4H)
            b = refs[3 + 3 * l][...]                  # (1, 4H)

            # x-side gate contribution for ALL timesteps in a single MXU call;
            # bias folded in here (hoisted out of the recurrence).
            pre = jnp.dot(cur, w_ih, preferred_element_type=jnp.float32) + b  # (T*B, 4H)

            h = jnp.zeros((B, H), jnp.float32)
            c = jnp.zeros((B, H), jnp.float32)
            outs = []
            for t in range(T):                        # static unroll (T is small)
                gates = pre[t * B:(t + 1) * B, :] + jnp.dot(
                    h, w_hh, preferred_element_type=jnp.float32)   # (B, 4H)
                sig = jax.nn.sigmoid(gates)           # full-width EUP op
                i = sig[:, 0 * H:1 * H]
                f = sig[:, 1 * H:2 * H]
                o = sig[:, 3 * H:4 * H]
                g = jnp.tanh(gates[:, 2 * H:3 * H])
                c = f * c + i * g
                h = o * jnp.tanh(c)
                if l < num_layers - 1:
                    outs.append(h)
            if l < num_layers - 1:
                # layer -> layer handoff stays in VMEM (no HBM round-trip)
                cur = jnp.concatenate(outs, axis=0)   # (T*B, H)

        # fc on the last layer's last-timestep hidden state (== out[:, -1, :])
        out_ref[...] = (
            jnp.dot(h, fc_w_ref[...], preferred_element_type=jnp.float32)
            + fc_b_ref[...]
        ).astype(out_ref.dtype)

    return kernel


# ----------------------------- wrapper ---------------------------------------

def lstm_forward(params, x_btd):
    """Full module forward: stacked LSTM (zero initial states) + fc(out[:, -1, :]).

    x_btd: (B, T, D) batch-first, matching the PyTorch module.
    """
    B, T, D = x_btd.shape
    num_layers = len(params["lstm"])
    H = params["lstm"][0]["w_hh_t"].shape[0]
    OUT = params["fc"]["w_t"].shape[1]

    # time-major, flattened so one layer's x-side matmul covers all timesteps
    x_2d = jnp.transpose(x_btd, (1, 0, 2)).reshape(T * B, D)

    inputs = [x_2d]
    for layer in params["lstm"]:
        inputs += [layer["w_ih_t"], layer["w_hh_t"], layer["b"]]
    inputs += [params["fc"]["w_t"], params["fc"]["b"].reshape(1, OUT)]

    vmem = pl.BlockSpec(memory_space=pltpu.MemorySpace.VMEM)
    return pl.pallas_call(
        _make_fused_lstm_kernel(T, B, H, num_layers),
        out_shape=jax.ShapeDtypeStruct((B, OUT), x_btd.dtype),
        in_specs=[vmem] * len(inputs),
        out_specs=vmem,
    )(*inputs)


# ----------------------------- params & reference ----------------------------

def init_params(key, input_size, hidden, num_layers, out_features):
    """Deterministic init mimicking PyTorch's U(-1/sqrt(H), 1/sqrt(H))."""
    params = {"lstm": []}
    k_lstm = 1.0 / jnp.sqrt(hidden).astype(jnp.float32)
    for layer in range(num_layers):
        d_in = input_size if layer == 0 else hidden
        key, k1, k2, k3, k4 = jax.random.split(key, 5)
        w_ih = jax.random.uniform(k1, (4 * hidden, d_in), jnp.float32, -k_lstm, k_lstm)
        w_hh = jax.random.uniform(k2, (4 * hidden, hidden), jnp.float32, -k_lstm, k_lstm)
        b_ih = jax.random.uniform(k3, (4 * hidden,), jnp.float32, -k_lstm, k_lstm)
        b_hh = jax.random.uniform(k4, (4 * hidden,), jnp.float32, -k_lstm, k_lstm)
        params["lstm"].append({
            "w_ih_t": w_ih.T,                       # (d_in, 4H)  gate order i,f,g,o
            "w_hh_t": w_hh.T,                       # (H, 4H)
            "b": (b_ih + b_hh).reshape(1, 4 * hidden),
        })
    key, k1, k2 = jax.random.split(key, 3)
    k_fc = 1.0 / jnp.sqrt(hidden).astype(jnp.float32)
    w_fc = jax.random.uniform(k1, (out_features, hidden), jnp.float32, -k_fc, k_fc)
    b_fc = jax.random.uniform(k2, (out_features,), jnp.float32, -k_fc, k_fc)
    params["fc"] = {"w_t": w_fc.T, "b": b_fc}
    return params


def lstm_forward_ref(params, x_btd):
    """Pure-JAX reference (lax.scan) matching PyTorch nn.LSTM semantics."""
    x = jnp.transpose(x_btd, (1, 0, 2))  # (T, B, D)
    B = x.shape[1]
    for layer in params["lstm"]:
        H = layer["w_hh_t"].shape[0]

        def step(carry, x_t, layer=layer, H=H):
            h, c = carry
            gates = x_t @ layer["w_ih_t"] + h @ layer["w_hh_t"] + layer["b"]
            i = jax.nn.sigmoid(gates[:, 0 * H:1 * H])
            f = jax.nn.sigmoid(gates[:, 1 * H:2 * H])
            g = jnp.tanh(gates[:, 2 * H:3 * H])
            o = jax.nn.sigmoid(gates[:, 3 * H:4 * H])
            c = f * c + i * g
            h = o * jnp.tanh(c)
            return (h, c), h

        init = (jnp.zeros((B, H), jnp.float32), jnp.zeros((B, H), jnp.float32))
        _, x = jax.lax.scan(step, init, x)
    h_last = x[-1]
    return h_last @ params["fc"]["w_t"] + params["fc"]["b"]


# ----------------------------- main ------------------------------------------

if __name__ == "__main__":
    B, T, D, H, NUM_LAYERS = 2, 8, 16, 32, 2
    OUT = H  # assumed fc output size (see TODO above)

    key = jax.random.PRNGKey(0)
    key, kx, kp = jax.random.split(key, 3)
    x = jax.random.normal(kx, (B, T, D), jnp.float32)
    params = init_params(kp, D, H, NUM_LAYERS, OUT)

    out = jax.block_until_ready(jax.jit(lstm_forward)(params, x))
    ref = jax.block_until_ready(lstm_forward_ref(params, x))

    assert out.shape == (B, OUT), out.shape
    assert jnp.allclose(out, ref, atol=1e-5, rtol=1e-5), "mismatch vs pure-JAX reference"
    print("KERNEL_OK")
</pallas_src>

<mosaic_0001>
module attributes {stable_mosaic.version = 11 : i64} {
  func.func @kernel(%arg0: memref<16x16xf32, #tpu.memory_space<vmem>>, %arg1: memref<16x128xf32, #tpu.memory_space<vmem>>, %arg2: memref<32x128xf32, #tpu.memory_space<vmem>>, %arg3: memref<1x128xf32, #tpu.memory_space<vmem>>, %arg4: memref<32x128xf32, #tpu.memory_space<vmem>>, %arg5: memref<32x128xf32, #tpu.memory_space<vmem>>, %arg6: memref<1x128xf32, #tpu.memory_space<vmem>>, %arg7: memref<32x32xf32, #tpu.memory_space<vmem>>, %arg8: memref<1x32xf32, #tpu.memory_space<vmem>>, %arg9: memref<2x32xf32, #tpu.memory_space<vmem>>) attributes {dimension_semantics = [], scalar_prefetch = 0 : i64, scratch_operands = 0 : i64, tpu.core_type = #tpu.core_type<tc>} {
    %c0 = arith.constant 0 : index
    %c0_0 = arith.constant 0 : index
    %0 = vector.load %arg0[%c0, %c0_0] : memref<16x16xf32, #tpu.memory_space<vmem>>, vector<16x16xf32>
    %c0_1 = arith.constant 0 : index
    %c0_2 = arith.constant 0 : index
    %1 = vector.load %arg1[%c0_1, %c0_2] : memref<16x128xf32, #tpu.memory_space<vmem>>, vector<16x128xf32>
    %c0_3 = arith.constant 0 : index
    %c0_4 = arith.constant 0 : index
    %2 = vector.load %arg2[%c0_3, %c0_4] : memref<32x128xf32, #tpu.memory_space<vmem>>, vector<32x128xf32>
    %c0_5 = arith.constant 0 : index
    %c0_6 = arith.constant 0 : index
    %3 = vector.load %arg3[%c0_5, %c0_6] : memref<1x128xf32, #tpu.memory_space<vmem>>, vector<1x128xf32>
    %cst = arith.constant dense<0.000000e+00> : vector<16x128xf32>
    %4 = tpu.matmul %0, %1, %cst {dimension_numbers = #tpu.dot_dimension_numbers<[1], [0], [0], [1], [0, 0, 1, 1], [], []>} : vector<16x16xf32>, vector<16x128xf32>, vector<16x128xf32> -> vector<16x128xf32>
    %5 = vector.broadcast %3 : vector<1x128xf32> to vector<16x128xf32>
    %6 = arith.addf %4, %5 : vector<16x128xf32>
    %cst_7 = arith.constant 0.000000e+00 : f32
    %7 = vector.broadcast %cst_7 : f32 to vector<2x32xf32>
    %cst_8 = arith.constant 0.000000e+00 : f32
    %8 = vector.broadcast %cst_8 : f32 to vector<2x32xf32>
    %9 = vector.extract_strided_slice %6 {offsets = [0, 0], sizes = [2, 128], strides = [1, 1]} : vector<16x128xf32> to vector<2x128xf32>
    %cst_9 = arith.constant dense<0.000000e+00> : vector<2x128xf32>
    %10 = tpu.matmul %7, %2, %cst_9 {dimension_numbers = #tpu.dot_dimension_numbers<[1], [0], [0], [1], [0, 0, 1, 1], [], []>} : vector<2x32xf32>, vector<32x128xf32>, vector<2x128xf32> -> vector<2x128xf32>
    %11 = arith.addf %9, %10 : vector<2x128xf32>
    %12 = arith.negf %11 : vector<2x128xf32>
    %13 = math.exp %12 : vector<2x128xf32>
    %cst_10 = arith.constant 1.000000e+00 : f32
    %14 = vector.broadcast %cst_10 : f32 to vector<2x128xf32>
    %15 = arith.addf %14, %13 : vector<2x128xf32>
    %16 = arith.divf %14, %15 : vector<2x128xf32>
    %17 = vector.extract_strided_slice %16 {offsets = [0, 0], sizes = [2, 32], strides = [1, 1]} : vector<2x128xf32> to vector<2x32xf32>
    %18 = vector.extract_strided_slice %16 {offsets = [0, 32], sizes = [2, 32], strides = [1, 1]} : vector<2x128xf32> to vector<2x32xf32>
    %19 = vector.extract_strided_slice %16 {offsets = [0, 96], sizes = [2, 32], strides = [1, 1]} : vector<2x128xf32> to vector<2x32xf32>
    %20 = vector.extract_strided_slice %11 {offsets = [0, 64], sizes = [2, 32], strides = [1, 1]} : vector<2x128xf32> to vector<2x32xf32>
    %21 = math.tanh %20 : vector<2x32xf32>
    %22 = arith.mulf %18, %8 : vector<2x32xf32>
    %23 = arith.mulf %17, %21 : vector<2x32xf32>
    %24 = arith.addf %22, %23 : vector<2x32xf32>
    %25 = math.tanh %24 : vector<2x32xf32>
    %26 = arith.mulf %19, %25 : vector<2x32xf32>
    %27 = vector.extract_strided_slice %6 {offsets = [2, 0], sizes = [2, 128], strides = [1, 1]} : vector<16x128xf32> to vector<2x128xf32>
    %cst_11 = arith.constant dense<0.000000e+00> : vector<2x128xf32>
    %28 = tpu.matmul %26, %2, %cst_11 {dimension_numbers = #tpu.dot_dimension_numbers<[1], [0], [0], [1], [0, 0, 1, 1], [], []>} : vector<2x32xf32>, vector<32x128xf32>, vector<2x128xf32> -> vector<2x128xf32>
    %29 = arith.addf %27, %28 : vector<2x128xf32>
    %30 = arith.negf %29 : vector<2x128xf32>
    %31 = math.exp %30 : vector<2x128xf32>
    %cst_12 = arith.constant 1.000000e+00 : f32
    %32 = vector.broadcast %cst_12 : f32 to vector<2x128xf32>
    %33 = arith.addf %32, %31 : vector<2x128xf32>
    %34 = arith.divf %32, %33 : vector<2x128xf32>
    %35 = vector.extract_strided_slice %34 {offsets = [0, 0], sizes = [2, 32], strides = [1, 1]} : vector<2x128xf32> to vector<2x32xf32>
    %36 = vector.extract_strided_slice %34 {offsets = [0, 32], sizes = [2, 32], strides = [1, 1]} : vector<2x128xf32> to vector<2x32xf32>
    %37 = vector.extract_strided_slice %34 {offsets = [0, 96], sizes = [2, 32], strides = [1, 1]} : vector<2x128xf32> to vector<2x32xf32>
    %38 = vector.extract_strided_slice %29 {offsets = [0, 64], sizes = [2, 32], strides = [1, 1]} : vector<2x128xf32> to vector<2x32xf32>
    %39 = math.tanh %38 : vector<2x32xf32>
    %40 = arith.mulf %36, %24 : vector<2x32xf32>
    %41 = arith.mulf %35, %39 : vector<2x32xf32>
    %42 = arith.addf %40, %41 : vector<2x32xf32>
    %43 = math.tanh %42 : vector<2x32xf32>
    %44 = arith.mulf %37, %43 : vector<2x32xf32>
    %45 = vector.extract_strided_slice %6 {offsets = [4, 0], sizes = [2, 128], strides = [1, 1]} : vector<16x128xf32> to vector<2x128xf32>
    %cst_13 = arith.constant dense<0.000000e+00> : vector<2x128xf32>
    %46 = tpu.matmul %44, %2, %cst_13 {dimension_numbers = #tpu.dot_dimension_numbers<[1], [0], [0], [1], [0, 0, 1, 1], [], []>} : vector<2x32xf32>, vector<32x128xf32>, vector<2x128xf32> -> vector<2x128xf32>
    %47 = arith.addf %45, %46 : vector<2x128xf32>
    %48 = arith.negf %47 : vector<2x128xf32>
    %49 = math.exp %48 : vector<2x128xf32>
    %cst_14 = arith.constant 1.000000e+00 : f32
    %50 = vector.broadcast %cst_14 : f32 to vector<2x128xf32>
    %51 = arith.addf %50, %49 : vector<2x128xf32>
    %52 = arith.divf %50, %51 : vector<2x128xf32>
    %53 = vector.extract_strided_slice %52 {offsets = [0, 0], sizes = [2, 32], strides = [1, 1]} : vector<2x128xf32> to vector<2x32xf32>
    %54 = vector.extract_strided_slice %52 {offsets = [0, 32], sizes = [2, 32], strides = [1, 1]} : vector<2x128xf32> to vector<2x32xf32>
    %55 = vector.extract_strided_slice %52 {offsets = [0, 96], sizes = [2, 32], strides = [1, 1]} : vector<2x128xf32> to vector<2x32xf32>
    %56 = vector.extract_strided_slice %47 {offsets = [0, 64], sizes = [2, 32], strides = [1, 1]} : vector<2x128xf32> to vector<2x32xf32>
    %57 = math.tanh %56 : vector<2x32xf32>
    %58 = arith.mulf %54, %42 : vector<2x32xf32>
    %59 = arith.mulf %53, %57 : vector<2x32xf32>
    %60 = arith.addf %58, %59 : vector<2x32xf32>
    %61 = math.tanh %60 : vector<2x32xf32>
    %62 = arith.mulf %55, %61 : vector<2x32xf32>
    %63 = vector.extract_strided_slice %6 {offsets = [6, 0], sizes = [2, 128], strides = [1, 1]} : vector<16x128xf32> to vector<2x128xf32>
    %cst_15 = arith.constant dense<0.000000e+00> : vector<2x128xf32>
    %64 = tpu.matmul %62, %2, %cst_15 {dimension_numbers = #tpu.dot_dimension_numbers<[1], [0], [0], [1], [0, 0, 1, 1], [], []>} : vector<2x32xf32>, vector<32x128xf32>, vector<2x128xf32> -> vector<2x128xf32>
    %65 = arith.addf %63, %64 : vector<2x128xf32>
    %66 = arith.negf %65 : vector<2x128xf32>
    %67 = math.exp %66 : vector<2x128xf32>
    %cst_16 = arith.constant 1.000000e+00 : f32
    %68 = vector.broadcast %cst_16 : f32 to vector<2x128xf32>
    %69 = arith.addf %68, %67 : vector<2x128xf32>
    %70 = arith.divf %68, %69 : vector<2x128xf32>
    %71 = vector.extract_strided_slice %70 {offsets = [0, 0], sizes = [2, 32], strides = [1, 1]} : vector<2x128xf32> to vector<2x32xf32>
    %72 = vector.extract_strided_slice %70 {offsets = [0, 32], sizes = [2, 32], strides = [1, 1]} : vector<2x128xf32> to vector<2x32xf32>
    %73 = vector.extract_strided_slice %70 {offsets = [0, 96], sizes = [2, 32], strides = [1, 1]} : vector<2x128xf32> to vector<2x32xf32>
    %74 = vector.extract_strided_slice %65 {offsets = [0, 64], sizes = [2, 32], strides = [1, 1]} : vector<2x128xf32> to vector<2x32xf32>
    %75 = math.tanh %74 : vector<2x32xf32>
    %76 = arith.mulf %72, %60 : vector<2x32xf32>
    %77 = arith.mulf %71, %75 : vector<2x32xf32>
    %78 = arith.addf %76, %77 : vector<2x32xf32>
    %79 = math.tanh %78 : vector<2x32xf32>
    %80 = arith.mulf %73, %79 : vector<2x32xf32>
    %81 = vector.extract_strided_slice %6 {offsets = [8, 0], sizes = [2, 128], strides = [1, 1]} : vector<16x128xf32> to vector<2x128xf32>
    %cst_17 = arith.constant dense<0.000000e+00> : vector<2x128xf32>
    %82 = tpu.matmul %80, %2, %cst_17 {dimension_numbers = #tpu.dot_dimension_numbers<[1], [0], [0], [1], [0, 0, 1, 1], [], []>} : vector<2x32xf32>, vector<32x128xf32>, vector<2x128xf32> -> vector<2x128xf32>
    %83 = arith.addf %81, %82 : vector<2x128xf32>
    %84 = arith.negf %83 : vector<2x128xf32>
    %85 = math.exp %84 : vector<2x128xf32>
    %cst_18 = arith.constant 1.000000e+00 : f32
    %86 = vector.broadcast %cst_18 : f32 to vector<2x128xf32>
    %87 = arith.addf %86, %85 : vector<2x128xf32>
    %88 = arith.divf %86, %87 : vector<2x128xf32>
    %89 = vector.extract_strided_slice %88 {offsets = [0, 0], sizes = [2, 32], strides = [1, 1]} : vector<2x128xf32> to vector<2x32xf32>
    %90 = vector.extract_strided_slice %88 {offsets = [0, 32], sizes = [2, 32], strides = [1, 1]} : vector<2x128xf32> to vector<2x32xf32>
    %91 = vector.extract_strided_slice %88 {offsets = [0, 96], sizes = [2, 32], strides = [1, 1]} : vector<2x128xf32> to vector<2x32xf32>
    %92 = vector.extract_strided_slice %83 {offsets = [0, 64], sizes = [2, 32], strides = [1, 1]} : vector<2x128xf32> to vector<2x32xf32>
    %93 = math.tanh %92 : vector<2x32xf32>
    %94 = arith.mulf %90, %78 : vector<2x32xf32>
    %95 = arith.mulf %89, %93 : vector<2x32xf32>
    %96 = arith.addf %94, %95 : vector<2x32xf32>
    %97 = math.tanh %96 : vector<2x32xf32>
    %98 = arith.mulf %91, %97 : vector<2x32xf32>
    %99 = vector.extract_strided_slice %6 {offsets = [10, 0], sizes = [2, 128], strides = [1, 1]} : vector<16x128xf32> to vector<2x128xf32>
    %cst_19 = arith.constant dense<0.000000e+00> : vector<2x128xf32>
    %100 = tpu.matmul %98, %2, %cst_19 {dimension_numbers = #tpu.dot_dimension_numbers<[1], [0], [0], [1], [0, 0, 1, 1], [], []>} : vector<2x32xf32>, vector<32x128xf32>, vector<2x128xf32> -> vector<2x128xf32>
    %101 = arith.addf %99, %100 : vector<2x128xf32>
    %102 = arith.negf %101 : vector<2x128xf32>
    %103 = math.exp %102 : vector<2x128xf32>
    %cst_20 = arith.constant 1.000000e+00 : f32
    %104 = vector.broadcast %cst_20 : f32 to vector<2x128xf32>
    %105 = arith.addf %104, %103 : vector<2x128xf32>
    %106 = arith.divf %104, %105 : vector<2x128xf32>
    %107 = vector.extract_strided_slice %106 {offsets = [0, 0], sizes = [2, 32], strides = [1, 1]} : vector<2x128xf32> to vector<2x32xf32>
    %108 = vector.extract_strided_slice %106 {offsets = [0, 32], sizes = [2, 32], strides = [1, 1]} : vector<2x128xf32> to vector<2x32xf32>
    %109 = vector.extract_strided_slice %106 {offsets = [0, 96], sizes = [2, 32], strides = [1, 1]} : vector<2x128xf32> to vector<2x32xf32>
    %110 = vector.extract_strided_slice %101 {offsets = [0, 64], sizes = [2, 32], strides = [1, 1]} : vector<2x128xf32> to vector<2x32xf32>
    %111 = math.tanh %110 : vector<2x32xf32>
    %112 = arith.mulf %108, %96 : vector<2x32xf32>
    %113 = arith.mulf %107, %111 : vector<2x32xf32>
    %114 = arith.addf %112, %113 : vector<2x32xf32>
    %115 = math.tanh %114 : vector<2x32xf32>
    %116 = arith.mulf %109, %115 : vector<2x32xf32>
    %117 = vector.extract_strided_slice %6 {offsets = [12, 0], sizes = [2, 128], strides = [1, 1]} : vector<16x128xf32> to vector<2x128xf32>
    %cst_21 = arith.constant dense<0.000000e+00> : vector<2x128xf32>
    %118 = tpu.matmul %116, %2, %cst_21 {dimension_numbers = #tpu.dot_dimension_numbers<[1], [0], [0], [1], [0, 0, 1, 1], [], []>} : vector<2x32xf32>, vector<32x128xf32>, vector<2x128xf32> -> vector<2x128xf32>
    %119 = arith.addf %117, %118 : vector<2x128xf32>
    %120 = arith.negf %119 : vector<2x128xf32>
    %121 = math.exp %120 : vector<2x128xf32>
    %cst_22 = arith.constant 1.000000e+00 : f32
    %122 = vector.broadcast %cst_22 : f32 to vector<2x128xf32>
    %123 = arith.addf %122, %121 : vector<2x128xf32>
    %124 = arith.divf %122, %123 : vector<2x128xf32>
    %125 = vector.extract_strided_slice %124 {offsets = [0, 0], sizes = [2, 32], strides = [1, 1]} : vector<2x128xf32> to vector<2x32xf32>
    %126 = vector.extract_strided_slice %124 {offsets = [0, 32], sizes = [2, 32], strides = [1, 1]} : vector<2x128xf32> to vector<2x32xf32>
    %127 = vector.extract_strided_slice %124 {offsets = [0, 96], sizes = [2, 32], strides = [1, 1]} : vector<2x128xf32> to vector<2x32xf32>
    %128 = vector.extract_strided_slice %119 {offsets = [0, 64], sizes = [2, 32], strides = [1, 1]} : vector<2x128xf32> to vector<2x32xf32>
    %129 = math.tanh %128 : vector<2x32xf32>
    %130 = arith.mulf %126, %114 : vector<2x32xf32>
    %131 = arith.mulf %125, %129 : vector<2x32xf32>
    %132 = arith.addf %130, %131 : vector<2x32xf32>
    %133 = math.tanh %132 : vector<2x32xf32>
    %134 = arith.mulf %127, %133 : vector<2x32xf32>
    %135 = vector.extract_strided_slice %6 {offsets = [14, 0], sizes = [2, 128], strides = [1, 1]} : vector<16x128xf32> to vector<2x128xf32>
    %cst_23 = arith.constant dense<0.000000e+00> : vector<2x128xf32>
    %136 = tpu.matmul %134, %2, %cst_23 {dimension_numbers = #tpu.dot_dimension_numbers<[1], [0], [0], [1], [0, 0, 1, 1], [], []>} : vector<2x32xf32>, vector<32x128xf32>, vector<2x128xf32> -> vector<2x128xf32>
    %137 = arith.addf %135, %136 : vector<2x128xf32>
    %138 = arith.negf %137 : vector<2x128xf32>
    %139 = math.exp %138 : vector<2x128xf32>
    %cst_24 = arith.constant 1.000000e+00 : f32
    %140 = vector.broadcast %cst_24 : f32 to vector<2x128xf32>
    %141 = arith.addf %140, %139 : vector<2x128xf32>
    %142 = arith.divf %140, %141 : vector<2x128xf32>
    %143 = vector.extract_strided_slice %142 {offsets = [0, 0], sizes = [2, 32], strides = [1, 1]} : vector<2x128xf32> to vector<2x32xf32>
    %144 = vector.extract_strided_slice %142 {offsets = [0, 32], sizes = [2, 32], strides = [1, 1]} : vector<2x128xf32> to vector<2x32xf32>
    %145 = vector.extract_strided_slice %142 {offsets = [0, 96], sizes = [2, 32], strides = [1, 1]} : vector<2x128xf32> to vector<2x32xf32>
    %146 = vector.extract_strided_slice %137 {offsets = [0, 64], sizes = [2, 32], strides = [1, 1]} : vector<2x128xf32> to vector<2x32xf32>
    %147 = math.tanh %146 : vector<2x32xf32>
    %148 = arith.mulf %144, %132 : vector<2x32xf32>
    %149 = arith.mulf %143, %147 : vector<2x32xf32>
    %150 = arith.addf %148, %149 : vector<2x32xf32>
    %151 = math.tanh %150 : vector<2x32xf32>
    %152 = arith.mulf %145, %151 : vector<2x32xf32>
    %153 = tpu.concatenate %26, %44, %62, %80, %98, %116, %134, %152 in 0 : vector<2x32xf32>, vector<2x32xf32>, vector<2x32xf32>, vector<2x32xf32>, vector<2x32xf32>, vector<2x32xf32>, vector<2x32xf32>, vector<2x32xf32> -> vector<16x32xf32>
    %c0_25 = arith.constant 0 : index
    %c0_26 = arith.constant 0 : index
    %154 = vector.load %arg4[%c0_25, %c0_26] : memref<32x128xf32, #tpu.memory_space<vmem>>, vector<32x128xf32>
    %c0_27 = arith.constant 0 : index
    %c0_28 = arith.constant 0 : index
    %155 = vector.load %arg5[%c0_27, %c0_28] : memref<32x128xf32, #tpu.memory_space<vmem>>, vector<32x128xf32>
    %c0_29 = arith.constant 0 : index
    %c0_30 = arith.constant 0 : index
    %156 = vector.load %arg6[%c0_29, %c0_30] : memref<1x128xf32, #tpu.memory_space<vmem>>, vector<1x128xf32>
    %cst_31 = arith.constant dense<0.000000e+00> : vector<16x128xf32>
    %157 = tpu.matmul %153, %154, %cst_31 {dimension_numbers = #tpu.dot_dimension_numbers<[1], [0], [0], [1], [0, 0, 1, 1], [], []>} : vector<16x32xf32>, vector<32x128xf32>, vector<16x128xf32> -> vector<16x128xf32>
    %158 = vector.broadcast %156 : vector<1x128xf32> to vector<16x128xf32>
    %159 = arith.addf %157, %158 : vector<16x128xf32>
    %cst_32 = arith.constant 0.000000e+00 : f32
    %160 = vector.broadcast %cst_32 : f32 to vector<2x32xf32>
    %cst_33 = arith.constant 0.000000e+00 : f32
    %161 = vector.broadcast %cst_33 : f32 to vector<2x32xf32>
    %162 = vector.extract_strided_slice %159 {offsets = [0, 0], sizes = [2, 128], strides = [1, 1]} : vector<16x128xf32> to vector<2x128xf32>
    %cst_34 = arith.constant dense<0.000000e+00> : vector<2x128xf32>
    %163 = tpu.matmul %160, %155, %cst_34 {dimension_numbers = #tpu.dot_dimension_numbers<[1], [0], [0], [1], [0, 0, 1, 1], [], []>} : vector<2x32xf32>, vector<32x128xf32>, vector<2x128xf32> -> vector<2x128xf32>
    %164 = arith.addf %162, %163 : vector<2x128xf32>
    %165 = arith.negf %164 : vector<2x128xf32>
    %166 = math.exp %165 : vector<2x128xf32>
    %cst_35 = arith.constant 1.000000e+00 : f32
    %167 = vector.broadcast %cst_35 : f32 to vector<2x128xf32>
    %168 = arith.addf %167, %166 : vector<2x128xf32>
    %169 = arith.divf %167, %168 : vector<2x128xf32>
    %170 = vector.extract_strided_slice %169 {offsets = [0, 0], sizes = [2, 32], strides = [1, 1]} : vector<2x128xf32> to vector<2x32xf32>
    %171 = vector.extract_strided_slice %169 {offsets = [0, 32], sizes = [2, 32], strides = [1, 1]} : vector<2x128xf32> to vector<2x32xf32>
    %172 = vector.extract_strided_slice %169 {offsets = [0, 96], sizes = [2, 32], strides = [1, 1]} : vector<2x128xf32> to vector<2x32xf32>
    %173 = vector.extract_strided_slice %164 {offsets = [0, 64], sizes = [2, 32], strides = [1, 1]} : vector<2x128xf32> to vector<2x32xf32>
    %174 = math.tanh %173 : vector<2x32xf32>
    %175 = arith.mulf %171, %161 : vector<2x32xf32>
    %176 = arith.mulf %170, %174 : vector<2x32xf32>
    %177 = arith.addf %175, %176 : vector<2x32xf32>
    %178 = math.tanh %177 : vector<2x32xf32>
    %179 = arith.mulf %172, %178 : vector<2x32xf32>
    %180 = vector.extract_strided_slice %159 {offsets = [2, 0], sizes = [2, 128], strides = [1, 1]} : vector<16x128xf32> to vector<2x128xf32>
    %cst_36 = arith.constant dense<0.000000e+00> : vector<2x128xf32>
    %181 = tpu.matmul %179, %155, %cst_36 {dimension_numbers = #tpu.dot_dimension_numbers<[1], [0], [0], [1], [0, 0, 1, 1], [], []>} : vector<2x32xf32>, vector<32x128xf32>, vector<2x128xf32> -> vector<2x128xf32>
    %182 = arith.addf %180, %181 : vector<2x128xf32>
    %183 = arith.negf %182 : vector<2x128xf32>
    %184 = math.exp %183 : vector<2x128xf32>
    %cst_37 = arith.constant 1.000000e+00 : f32
    %185 = vector.broadcast %cst_37 : f32 to vector<2x128xf32>
    %186 = arith.addf %185, %184 : vector<2x128xf32>
    %187 = arith.divf %185, %186 : vector<2x128xf32>
    %188 = vector.extract_strided_slice %187 {offsets = [0, 0], sizes = [2, 32], strides = [1, 1]} : vector<2x128xf32> to vector<2x32xf32>
    %189 = vector.extract_strided_slice %187 {offsets = [0, 32], sizes = [2, 32], strides = [1, 1]} : vector<2x128xf32> to vector<2x32xf32>
    %190 = vector.extract_strided_slice %187 {offsets = [0, 96], sizes = [2, 32], strides = [1, 1]} : vector<2x128xf32> to vector<2x32xf32>
    %191 = vector.extract_strided_slice %182 {offsets = [0, 64], sizes = [2, 32], strides = [1, 1]} : vector<2x128xf32> to vector<2x32xf32>
    %192 = math.tanh %191 : vector<2x32xf32>
    %193 = arith.mulf %189, %177 : vector<2x32xf32>
    %194 = arith.mulf %188, %192 : vector<2x32xf32>
    %195 = arith.addf %193, %194 : vector<2x32xf32>
    %196 = math.tanh %195 : vector<2x32xf32>
    %197 = arith.mulf %190, %196 : vector<2x32xf32>
    %198 = vector.extract_strided_slice %159 {offsets = [4, 0], sizes = [2, 128], strides = [1, 1]} : vector<16x128xf32> to vector<2x128xf32>
    %cst_38 = arith.constant dense<0.000000e+00> : vector<2x128xf32>
    %199 = tpu.matmul %197, %155, %cst_38 {dimension_numbers = #tpu.dot_dimension_numbers<[1], [0], [0], [1], [0, 0, 1, 1], [], []>} : vector<2x32xf32>, vector<32x128xf32>, vector<2x128xf32> -> vector<2x128xf32>
    %200 = arith.addf %198, %199 : vector<2x128xf32>
    %201 = arith.negf %200 : vector<2x128xf32>
    %202 = math.exp %201 : vector<2x128xf32>
    %cst_39 = arith.constant 1.000000e+00 : f32
    %203 = vector.broadcast %cst_39 : f32 to vector<2x128xf32>
    %204 = arith.addf %203, %202 : vector<2x128xf32>
    %205 = arith.divf %203, %204 : vector<2x128xf32>
    %206 = vector.extract_strided_slice %205 {offsets = [0, 0], sizes = [2, 32], strides = [1, 1]} : vector<2x128xf32> to vector<2x32xf32>
    %207 = vector.extract_strided_slice %205 {offsets = [0, 32], sizes = [2, 32], strides = [1, 1]} : vector<2x128xf32> to vector<2x32xf32>
    %208 = vector.extract_strided_slice %205 {offsets = [0, 96], sizes = [2, 32], strides = [1, 1]} : vector<2x128xf32> to vector<2x32xf32>
    %209 = vector.extract_strided_slice %200 {offsets = [0, 64], sizes = [2, 32], strides = [1, 1]} : vector<2x128xf32> to vector<2x32xf32>
    %210 = math.tanh %209 : vector<2x32xf32>
    %211 = arith.mulf %207, %195 : vector<2x32xf32>
    %212 = arith.mulf %206, %210 : vector<2x32xf32>
    %213 = arith.addf %211, %212 : vector<2x32xf32>
    %214 = math.tanh %213 : vector<2x32xf32>
    %215 = arith.mulf %208, %214 : vector<2x32xf32>
    %216 = vector.extract_strided_slice %159 {offsets = [6, 0], sizes = [2, 128], strides = [1, 1]} : vector<16x128xf32> to vector<2x128xf32>
    %cst_40 = arith.constant dense<0.000000e+00> : vector<2x128xf32>
    %217 = tpu.matmul %215, %155, %cst_40 {dimension_numbers = #tpu.dot_dimension_numbers<[1], [0], [0], [1], [0, 0, 1, 1], [], []>} : vector<2x32xf32>, vector<32x128xf32>, vector<2x128xf32> -> vector<2x128xf32>
    %218 = arith.addf %216, %217 : vector<2x128xf32>
    %219 = arith.negf %218 : vector<2x128xf32>
    %220 = math.exp %219 : vector<2x128xf32>
    %cst_41 = arith.constant 1.000000e+00 : f32
    %221 = vector.broadcast %cst_41 : f32 to vector<2x128xf32>
    %222 = arith.addf %221, %220 : vector<2x128xf32>
    %223 = arith.divf %221, %222 : vector<2x128xf32>
    %224 = vector.extract_strided_slice %223 {offsets = [0, 0], sizes = [2, 32], strides = [1, 1]} : vector<2x128xf32> to vector<2x32xf32>
    %225 = vector.extract_strided_slice %223 {offsets = [0, 32], sizes = [2, 32], strides = [1, 1]} : vector<2x128xf32> to vector<2x32xf32>
    %226 = vector.extract_strided_slice %223 {offsets = [0, 96], sizes = [2, 32], strides = [1, 1]} : vector<2x128xf32> to vector<2x32xf32>
    %227 = vector.extract_strided_slice %218 {offsets = [0, 64], sizes = [2, 32], strides = [1, 1]} : vector<2x128xf32> to vector<2x32xf32>
    %228 = math.tanh %227 : vector<2x32xf32>
    %229 = arith.mulf %225, %213 : vector<2x32xf32>
    %230 = arith.mulf %224, %228 : vector<2x32xf32>
    %231 = arith.addf %229, %230 : vector<2x32xf32>
    %232 = math.tanh %231 : vector<2x32xf32>
    %233 = arith.mulf %226, %232 : vector<2x32xf32>
    %234 = vector.extract_strided_slice %159 {offsets = [8, 0], sizes = [2, 128], strides = [1, 1]} : vector<16x128xf32> to vector<2x128xf32>
    %cst_42 = arith.constant dense<0.000000e+00> : vector<2x128xf32>
    %235 = tpu.matmul %233, %155, %cst_42 {dimension_numbers = #tpu.dot_dimension_numbers<[1], [0], [0], [1], [0, 0, 1, 1], [], []>} : vector<2x32xf32>, vector<32x128xf32>, vector<2x128xf32> -> vector<2x128xf32>
    %236 = arith.addf %234, %235 : vector<2x128xf32>
    %237 = arith.negf %236 : vector<2x128xf32>
    %238 = math.exp %237 : vector<2x128xf32>
    %cst_43 = arith.constant 1.000000e+00 : f32
    %239 = vector.broadcast %cst_43 : f32 to vector<2x128xf32>
    %240 = arith.addf %239, %238 : vector<2x128xf32>
    %241 = arith.divf %239, %240 : vector<2x128xf32>
    %242 = vector.extract_strided_slice %241 {offsets = [0, 0], sizes = [2, 32], strides = [1, 1]} : vector<2x128xf32> to vector<2x32xf32>
    %243 = vector.extract_strided_slice %241 {offsets = [0, 32], sizes = [2, 32], strides = [1, 1]} : vector<2x128xf32> to vector<2x32xf32>
    %244 = vector.extract_strided_slice %241 {offsets = [0, 96], sizes = [2, 32], strides = [1, 1]} : vector<2x128xf32> to vector<2x32xf32>
    %245 = vector.extract_strided_slice %236 {offsets = [0, 64], sizes = [2, 32], strides = [1, 1]} : vector<2x128xf32> to vector<2x32xf32>
    %246 = math.tanh %245 : vector<2x32xf32>
    %247 = arith.mulf %243, %231 : vector<2x32xf32>
    %248 = arith.mulf %242, %246 : vector<2x32xf32>
    %249 = arith.addf %247, %248 : vector<2x32xf32>
    %250 = math.tanh %249 : vector<2x32xf32>
    %251 = arith.mulf %244, %250 : vector<2x32xf32>
    %252 = vector.extract_strided_slice %159 {offsets = [10, 0], sizes = [2, 128], strides = [1, 1]} : vector<16x128xf32> to vector<2x128xf32>
    %cst_44 = arith.constant dense<0.000000e+00> : vector<2x128xf32>
    %253 = tpu.matmul %251, %155, %cst_44 {dimension_numbers = #tpu.dot_dimension_numbers<[1], [0], [0], [1], [0, 0, 1, 1], [], []>} : vector<2x32xf32>, vector<32x128xf32>, vector<2x128xf32> -> vector<2x128xf32>
    %254 = arith.addf %252, %253 : vector<2x128xf32>
    %255 = arith.negf %254 : vector<2x128xf32>
    %256 = math.exp %255 : vector<2x128xf32>
    %cst_45 = arith.constant 1.000000e+00 : f32
    %257 = vector.broadcast %cst_45 : f32 to vector<2x128xf32>
    %258 = arith.addf %257, %256 : vector<2x128xf32>
    %259 = arith.divf %257, %258 : vector<2x128xf32>
    %260 = vector.extract_strided_slice %259 {offsets = [0, 0], sizes = [2, 32], strides = [1, 1]} : vector<2x128xf32> to vector<2x32xf32>
    %261 = vector.extract_strided_slice %259 {offsets = [0, 32], sizes = [2, 32], strides = [1, 1]} : vector<2x128xf32> to vector<2x32xf32>
    %262 = vector.extract_strided_slice %259 {offsets = [0, 96], sizes = [2, 32], strides = [1, 1]} : vector<2x128xf32> to vector<2x32xf32>
    %263 = vector.extract_strided_slice %254 {offsets = [0, 64], sizes = [2, 32], strides = [1, 1]} : vector<2x128xf32> to vector<2x32xf32>
    %264 = math.tanh %263 : vector<2x32xf32>
    %265 = arith.mulf %261, %249 : vector<2x32xf32>
    %266 = arith.mulf %260, %264 : vector<2x32xf32>
    %267 = arith.addf %265, %266 : vector<2x32xf32>
    %268 = math.tanh %267 : vector<2x32xf32>
    %269 = arith.mulf %262, %268 : vector<2x32xf32>
    %270 = vector.extract_strided_slice %159 {offsets = [12, 0], sizes = [2, 128], strides = [1, 1]} : vector<16x128xf32> to vector<2x128xf32>
    %cst_46 = arith.constant dense<0.000000e+00> : vector<2x128xf32>
    %271 = tpu.matmul %269, %155, %cst_46 {dimension_numbers = #tpu.dot_dimension_numbers<[1], [0], [0], [1], [0, 0, 1, 1], [], []>} : vector<2x32xf32>, vector<32x128xf32>, vector<2x128xf32> -> vector<2x128xf32>
    %272 = arith.addf %270, %271 : vector<2x128xf32>
    %273 = arith.negf %272 : vector<2x128xf32>
    %274 = math.exp %273 : vector<2x128xf32>
    %cst_47 = arith.constant 1.000000e+00 : f32
    %275 = vector.broadcast %cst_47 : f32 to vector<2x128xf32>
    %276 = arith.addf %275, %274 : vector<2x128xf32>
    %277 = arith.divf %275, %276 : vector<2x128xf32>
    %278 = vector.extract_strided_slice %277 {offsets = [0, 0], sizes = [2, 32], strides = [1, 1]} : vector<2x128xf32> to vector<2x32xf32>
    %279 = vector.extract_strided_slice %277 {offsets = [0, 32], sizes = [2, 32], strides = [1, 1]} : vector<2x128xf32> to vector<2x32xf32>
    %280 = vector.extract_strided_slice %277 {offsets = [0, 96], sizes = [2, 32], strides = [1, 1]} : vector<2x128xf32> to vector<2x32xf32>
    %281 = vector.extract_strided_slice %272 {offsets = [0, 64], sizes = [2, 32], strides = [1, 1]} : vector<2x128xf32> to vector<2x32xf32>
    %282 = math.tanh %281 : vector<2x32xf32>
    %283 = arith.mulf %279, %267 : vector<2x32xf32>
    %284 = arith.mulf %278, %282 : vector<2x32xf32>
    %285 = arith.addf %283, %284 : vector<2x32xf32>
    %286 = math.tanh %285 : vector<2x32xf32>
    %287 = arith.mulf %280, %286 : vector<2x32xf32>
    %288 = vector.extract_strided_slice %159 {offsets = [14, 0], sizes = [2, 128], strides = [1, 1]} : vector<16x128xf32> to vector<2x128xf32>
    %cst_48 = arith.constant dense<0.000000e+00> : vector<2x128xf32>
    %289 = tpu.matmul %287, %155, %cst_48 {dimension_numbers = #tpu.dot_dimension_numbers<[1], [0], [0], [1], [0, 0, 1, 1], [], []>} : vector<2x32xf32>, vector<32x128xf32>, vector<2x128xf32> -> vector<2x128xf32>
    %290 = arith.addf %288, %289 : vector<2x128xf32>
    %291 = arith.negf %290 : vector<2x128xf32>
    %292 = math.exp %291 : vector<2x128xf32>
    %cst_49 = arith.constant 1.000000e+00 : f32
    %293 = vector.broadcast %cst_49 : f32 to vector<2x128xf32>
    %294 = arith.addf %293, %292 : vector<2x128xf32>
    %295 = arith.divf %293, %294 : vector<2x128xf32>
    %296 = vector.extract_strided_slice %295 {offsets = [0, 0], sizes = [2, 32], strides = [1, 1]} : vector<2x128xf32> to vector<2x32xf32>
    %297 = vector.extract_strided_slice %295 {offsets = [0, 32], sizes = [2, 32], strides = [1, 1]} : vector<2x128xf32> to vector<2x32xf32>
    %298 = vector.extract_strided_slice %295 {offsets = [0, 96], sizes = [2, 32], strides = [1, 1]} : vector<2x128xf32> to vector<2x32xf32>
    %299 = vector.extract_strided_slice %290 {offsets = [0, 64], sizes = [2, 32], strides = [1, 1]} : vector<2x128xf32> to vector<2x32xf32>
    %300 = math.tanh %299 : vector<2x32xf32>
    %301 = arith.mulf %297, %285 : vector<2x32xf32>
    %302 = arith.mulf %296, %300 : vector<2x32xf32>
    %303 = arith.addf %301, %302 : vector<2x32xf32>
    %304 = math.tanh %303 : vector<2x32xf32>
    %305 = arith.mulf %298, %304 : vector<2x32xf32>
    %c0_50 = arith.constant 0 : index
    %c0_51 = arith.constant 0 : index
    %306 = vector.load %arg7[%c0_50, %c0_51] : memref<32x32xf32, #tpu.memory_space<vmem>>, vector<32x32xf32>
    %cst_52 = arith.constant dense<0.000000e+00> : vector<2x32xf32>
    %307 = tpu.matmul %305, %306, %cst_52 {dimension_numbers = #tpu.dot_dimension_numbers<[1], [0], [0], [1], [0, 0, 1, 1], [], []>} : vector<2x32xf32>, vector<32x32xf32>, vector<2x32xf32> -> vector<2x32xf32>
    %c0_53 = arith.constant 0 : index
    %c0_54 = arith.constant 0 : index
    %308 = vector.load %arg8[%c0_53, %c0_54] : memref<1x32xf32, #tpu.memory_space<vmem>>, vector<1x32xf32>
    %309 = vector.broadcast %308 : vector<1x32xf32> to vector<2x32xf32>
    %310 = arith.addf %307, %309 : vector<2x32xf32>
    %c0_55 = arith.constant 0 : index
    %c0_56 = arith.constant 0 : index
    %311 = vector.load %arg9[%c0_55, %c0_56] : memref<2x32xf32, #tpu.memory_space<vmem>>, vector<2x32xf32>
    tpu.vector_store %arg9[%c0_55, %c0_56], %310 {strides = array<i32>} : memref<2x32xf32, #tpu.memory_space<vmem>>, vector<2x32xf32>,
    return
  }
}

</mosaic_0001>

<llo_original>
// kernel: lstm_forward.1
$region0: #{lstm_forward.1}
  #allocation0 [shape = 'u32[]', space=smem, size = 0x4, offset = 0x4, fixed_abs, tag = 'smem constant byte address 0x4 - core index']
  #allocation1 [shape = 'u32[144,128]{1,0:T(1,128)}', space=vmem, size = 0x12000, scoped, tag = 'internal scratch']
  %s0 = inlined_call_operand.vmem [shape: f32[16,16], index: 0, kind: input, shape index: {}]
  %s1 = inlined_call_operand.hbm [shape: f32[16,128], index: 1, kind: input, shape index: {}]
  %s2 = inlined_call_operand.vmem [shape: f32[32,128], index: 2, kind: input, shape index: {}]
  %s3 = inlined_call_operand.vmem [shape: f32[1,128], index: 3, kind: input, shape index: {}]
  %s4 = inlined_call_operand.vmem [shape: f32[32,128], index: 4, kind: input, shape index: {}]
  %s5 = inlined_call_operand.hbm [shape: f32[32,128], index: 5, kind: input, shape index: {}]
  %s6 = inlined_call_operand.vmem [shape: f32[1,128], index: 6, kind: input, shape index: {}]
  %s7 = inlined_call_operand.hbm [shape: f32[32,32], index: 7, kind: input, shape index: {}]
  %s8 = inlined_call_operand.hbm [shape: f32[1,32], index: 8, kind: input, shape index: {}]
  %s9 = inlined_call_operand.hbm [shape: f32[2,32], index: 9, kind: output, shape index: {}]
  %s10 = sld [smem:[#allocation0]]
  $region62: #{lstm_forward.1} parent=0
    _
  %s12 = ssub.s32 1, %s10
  %s13 = scalar_select 0, %s12, %s10
  $region1: #{lstm_forward.1} parent=0
    #allocation2 [shape = 'u8[8192]{0}', space=vmem, size = 0x2000, scoped, tag = 'input window, operand 1, single buffered']
    #allocation3 [shape = 's32[1]{0}', space=sflag, size = 0x4, scoped, tag = 'scoped memory for lstm_forward.1']
    #allocation4 [shape = 's32[1]{0}', space=sflag, size = 0x4, scoped, tag = 'scoped memory for lstm_forward.1']
    #allocation5 [shape = 'u8[16384]{0}', space=vmem, size = 0x4000, scoped, tag = 'input window, operand 5, single buffered']
    #allocation6 [shape = 's32[1]{0}', space=sflag, size = 0x4, scoped, tag = 'scoped memory for lstm_forward.1']
    #allocation7 [shape = 'u8[16384]{0}', space=vmem, size = 0x4000, scoped, tag = 'input window, operand 7, single buffered']
    #allocation8 [shape = 'u8[512]{0}', space=vmem, size = 0x400, scoped, tag = 'input window, operand 8, single buffered']
    #allocation9 [shape = 's32[1]{0}', space=sflag, size = 0x4, scoped, tag = 'scoped memory for lstm_forward.1']
    #allocation10 [shape = 'u8[1024]{0}', space=vmem, size = 0x400, scoped, tag = 'output window, operand 0, single buffered']
    %14 = vsyncpa [#allocation3], 0
    %15 = vsyncpa [#allocation6], 0
    %16 = vsyncpa [#allocation9], 0
    %17 = vsyncpa [#allocation4], 0
    // Predicated region
    $region2: #{lstm_forward.1} parent=1 // pred_check
      _
    $region3: #{lstm_forward.1} parent=1 // pred_check_branch
      %19 = sbr.rel (0) target = $region5
    $region4: #{lstm_forward.1} parent=1 // pred_region
      _
    $region5: #{lstm_forward.1} parent=1 // pred_fallthru
      _
    // Predicated region
    $region6: #{lstm_forward.1} parent=1 // pred_check
      _
    $region7: #{lstm_forward.1} parent=1 // pred_check_branch
      %21 = sbr.rel (0) target = $region9
    $region8: #{lstm_forward.1} parent=1 // pred_region
      %s23 = ssub.s32 256, 256
      %24 = vsyncadd [#allocation3], %s23
      %s25 = sshll.u32 [#allocation2], 4
      %s26 = int_to_ptr.vmem [resolvable:$true] %s25
      %31 = dma.hbm_to_vmem [thread:$0]  %s1, 256, %s26, [#allocation3], 128, 128, 8
    $region9: #{lstm_forward.1} parent=1 // pred_fallthru
      _
    // Predicated region
    $region10: #{lstm_forward.1} parent=1 // pred_check
      _
    $region11: #{lstm_forward.1} parent=1 // pred_check_branch
      %33 = sbr.rel (0) target = $region13
    $region12: #{lstm_forward.1} parent=1 // pred_region
      _
    $region13: #{lstm_forward.1} parent=1 // pred_fallthru
      _
    // Predicated region
    $region14: #{lstm_forward.1} parent=1 // pred_check
      _
    $region15: #{lstm_forward.1} parent=1 // pred_check_branch
      %35 = sbr.rel (0) target = $region17
    $region16: #{lstm_forward.1} parent=1 // pred_region
      _
    $region17: #{lstm_forward.1} parent=1 // pred_fallthru
      _
    // Predicated region
    $region18: #{lstm_forward.1} parent=1 // pred_check
      _
    $region19: #{lstm_forward.1} parent=1 // pred_check_branch
      %37 = sbr.rel (0) target = $region21
    $region20: #{lstm_forward.1} parent=1 // pred_region
      _
    $region21: #{lstm_forward.1} parent=1 // pred_fallthru
      _
    // Predicated region
    $region22: #{lstm_forward.1} parent=1 // pred_check
      _
    $region23: #{lstm_forward.1} parent=1 // pred_check_branch
      %39 = sbr.rel (0) target = $region25
    $region24: #{lstm_forward.1} parent=1 // pred_region
      %s41 = ssub.s32 512, 512
      %42 = vsyncadd [#allocation6], %s41
      %s43 = sshll.u32 [#allocation5], 4
      %s44 = int_to_ptr.vmem [resolvable:$true] %s43
      %49 = dma.hbm_to_vmem [thread:$0]  %s5, 512, %s44, [#allocation6], 128, 128, 8
    $region25: #{lstm_forward.1} parent=1 // pred_fallthru
      _
    // Predicated region
    $region26: #{lstm_forward.1} parent=1 // pred_check
      _
    $region27: #{lstm_forward.1} parent=1 // pred_check_branch
      %51 = sbr.rel (0) target = $region29
    $region28: #{lstm_forward.1} parent=1 // pred_region
      _
    $region29: #{lstm_forward.1} parent=1 // pred_fallthru
      _
    // Predicated region
    $region30: #{lstm_forward.1} parent=1 // pred_check
      _
    $region31: #{lstm_forward.1} parent=1 // pred_check_branch
      %53 = sbr.rel (0) target = $region33
    $region32: #{lstm_forward.1} parent=1 // pred_region
      %s55 = ssub.s32 512, 512
      %56 = vsyncadd [#allocation6], %s55
      %s57 = sshll.u32 [#allocation7], 4
      %s58 = int_to_ptr.vmem [resolvable:$true] %s57
      %63 = dma.hbm_to_vmem [thread:$0]  %s7, 512, %s58, [#allocation6], 128, 128, 8
    $region33: #{lstm_forward.1} parent=1 // pred_fallthru
      _
    // Predicated region
    $region34: #{lstm_forward.1} parent=1 // pred_check
      _
    $region35: #{lstm_forward.1} parent=1 // pred_check_branch
      %65 = sbr.rel (0) target = $region37
    $region36: #{lstm_forward.1} parent=1 // pred_region
      %s67 = ssub.s32 16, 16
      %68 = vsyncadd [#allocation9], %s67
      %s70 = sshll.u32 [#allocation8], 4
      %s71 = int_to_ptr.vmem [resolvable:$true] %s70
      %73 = dma.hbm_to_vmem [thread:$0]  %s8, 16, %s71, [#allocation9]
    $region37: #{lstm_forward.1} parent=1 // pred_fallthru
      _
    // Predicated region
    $region38: #{lstm_forward.1} parent=1 // pred_check
      _
    $region39: #{lstm_forward.1} parent=1 // pred_check_branch
      %75 = sbr.rel (0) target = $region41
    $region40: #{lstm_forward.1} parent=1 // pred_region
      %76 = dma.done [#allocation3], 256
    $region41: #{lstm_forward.1} parent=1 // pred_fallthru
      _
    // Predicated region
    $region42: #{lstm_forward.1} parent=1 // pred_check
      _
    $region43: #{lstm_forward.1} parent=1 // pred_check_branch
      %78 = sbr.rel (0) target = $region45
    $region44: #{lstm_forward.1} parent=1 // pred_region
      %79 = dma.done [#allocation6], 512
    $region45: #{lstm_forward.1} parent=1 // pred_fallthru
      _
    // Predicated region
    $region46: #{lstm_forward.1} parent=1 // pred_check
      _
    $region47: #{lstm_forward.1} parent=1 // pred_check_branch
      %81 = sbr.rel (0) target = $region49
    $region48: #{lstm_forward.1} parent=1 // pred_region
      %82 = dma.done [#allocation6], 512
    $region49: #{lstm_forward.1} parent=1 // pred_fallthru
      _
    // Predicated region
    $region50: #{lstm_forward.1} parent=1 // pred_check
      _
    $region51: #{lstm_forward.1} parent=1 // pred_check_branch
      %84 = sbr.rel (0) target = $region53
    $region52: #{lstm_forward.1} parent=1 // pred_region
      %85 = dma.done [#allocation9], 16
    $region53: #{lstm_forward.1} parent=1 // pred_fallthru
      _
    %v86 = vld [vmem:[%s0] sm:$0xff]
    %v87 = vld [vmem:[%s0 + $0x8] sm:$0xff]
    %v88 = vld [vmem:[#allocation2] sm:$0xff]
    %v89 = vld [vmem:[#allocation2 + $0x8] sm:$0xff]
    %v90 = vld [vmem:[%s2] sm:$0xff]
    %v91 = vld [vmem:[%s2 + $0x8] sm:$0xff]
    %v92 = vld [vmem:[%s2 + $0x10] sm:$0xff]
    %v93 = vld [vmem:[%s2 + $0x18] sm:$0xff]
    %v94 = vld [vmem:[%s3] sm:$0x1]
    %v96 = vlaneseq
    %v97 = vshrl.u32 %v96, 7
    %v98 = vsub.s32 0, %v97
    %v99 = vrot.slane %v94, %v98
    %vm101 = vcmask 130048
    %v103 = vsel %vm101, %v86, 0
    %v106 = vsel %vm101, %v87, 0
    %108 = vmatprep.subr.mxu0 0.0
    %109 = vmatpush1.msra.mxu0 %v88
    %110 = vmatprep.subr.mxu0 0.0
    %111 = vmatpush1.msra.mxu0 %v89
    %112 = vmatprep.subr.mxu0 0.0
    %113 = vmatpush1.msra.mxu0 0.0
    %114 = vmatprep.subr.mxu0 0.0
    %115 = vmatpush1.msra.mxu0 0.0
    %116 = vmatprep.subr.mxu0 0.0
    %117 = vmatpush1.msra.mxu0 0.0
    %118 = vmatprep.subr.mxu0 0.0
    %119 = vmatpush1.msra.mxu0 0.0
    %120 = vmatprep.subr.mxu0 0.0
    %121 = vmatpush1.msra.mxu0 0.0
    %122 = vmatprep.subr.mxu0 0.0
    %123 = vmatpush1.msra.mxu0 0.0
    %124 = vmatprep.subr.mxu0 0.0
    %125 = vmatpush1.msra.mxu0 0.0
    %126 = vmatprep.subr.mxu0 0.0
    %127 = vmatpush1.msra.mxu0 0.0
    %128 = vmatprep.subr.mxu0 0.0
    %129 = vmatpush1.msra.mxu0 0.0
    %130 = vmatprep.subr.mxu0 0.0
    %131 = vmatpush1.msra.mxu0 0.0
    %132 = vmatprep.subr.mxu0 0.0
    %133 = vmatpush1.msra.mxu0 0.0
    %134 = vmatprep.subr.mxu0 0.0
    %135 = vmatpush1.msra.mxu0 0.0
    %136 = vmatprep.subr.mxu0 0.0
    %137 = vmatpush1.msra.mxu0 0.0
    %138 = vmatprep.subr.mxu0 0.0
    %139 = vmatpush1.msra.mxu0 0.0
    %140 = vmatprep.subr.mxu0 0.0
    %141 = vmatpush1.msra.mxu0 0.0
    %142 = vmatprep.subr.mxu0 0.0
    %143 = vmatpush1.msra.mxu0 0.0
    %144 = vmatprep.subr.mxu0 0.0
    %145 = vmatpush1.msra.mxu0 0.0
    %146 = vmatprep.subr.mxu0 0.0
    %147 = vmatpush1.msra.mxu0 0.0
    %148 = vmatprep.subr.mxu0 0.0
    %149 = vmatpush1.msra.mxu0 0.0
    %150 = vmatprep.subr.mxu0 0.0
    %151 = vmatpush1.msra.mxu0 0.0
    %152 = vmatprep.subr.mxu0 0.0
    %153 = vmatpush1.msra.mxu0 0.0
    %154 = vmatprep.subr.mxu0 0.0
    %155 = vmatpush1.msra.mxu0 0.0
    %156 = vmatprep.subr.mxu0 0.0
    %157 = vmatpush1.msra.mxu0 0.0
    %158 = vmatprep.subr.mxu0 0.0
    %159 = vmatpush1.msra.mxu0 0.0
    %160 = vmatprep.subr.mxu0 0.0
    %161 = vmatpush1.msra.mxu0 0.0
    %162 = vmatprep.subr.mxu0 0.0
    %163 = vmatpush1.msra.mxu0 0.0
    %164 = vmatprep.subr.mxu0 0.0
    %165 = vmatpush1.msra.mxu0 0.0
    %166 = vmatprep.subr.mxu0 0.0
    %167 = vmatpush1.msra.mxu0 0.0
    %168 = vmatprep.subr.mxu0 0.0
    %169 = vmatpush1.msra.mxu0 0.0
    %170 = vmatprep.subr.mxu0 0.0
    %171 = vmatpush1.msra.mxu0 0.0
    %172 = vmatprep.mubr.f32.mxu0 0.0
    %173 = vmatmul.mubr.f32.gmra.mrb[0].mxu0 %v103
    %v174 = vpop.f32.mrb[0].mxu0
    %v175 = vadd.f32 %v99, %v174
    %v176 = vpop.f32.mrb[0].mxu0
    %177 = vmatprep.mubr.f32.mxu0 0.0
    %178 = vmatmul.mubr.f32.gmra.mrb[0].mxu0 %v106
    %v179 = vpop.f32.mrb[0].mxu0
    %v180 = vadd.f32 %v99, %v179
    %v181 = vpop.f32.mrb[0].mxu0
    %182 = vdwg.mxu0
    %vm183 = vcmask 261120
    %v185 = vsel %vm183, 0.0, 0
    %187 = vmatprep.subr.mxu0 0.0
    %188 = vmatpush1.msra.mxu0 %v90
    %189 = vmatprep.subr.mxu0 0.0
    %190 = vmatpush1.msra.mxu0 %v91
    %191 = vmatprep.subr.mxu0 0.0
    %192 = vmatpush1.msra.mxu0 %v92
    %193 = vmatprep.subr.mxu0 0.0
    %194 = vmatpush1.msra.mxu0 %v93
    %195 = vmatprep.subr.mxu0 0.0
    %196 = vmatpush1.msra.mxu0 0.0
    %197 = vmatprep.subr.mxu0 0.0
    %198 = vmatpush1.msra.mxu0 0.0
    %199 = vmatprep.subr.mxu0 0.0
    %200 = vmatpush1.msra.mxu0 0.0
    %201 = vmatprep.subr.mxu0 0.0
    %202 = vmatpush1.msra.mxu0 0.0
    %203 = vmatprep.subr.mxu0 0.0
    %204 = vmatpush1.msra.mxu0 0.0
    %205 = vmatprep.subr.mxu0 0.0
    %206 = vmatpush1.msra.mxu0 0.0
    %207 = vmatprep.subr.mxu0 0.0
    %208 = vmatpush1.msra.mxu0 0.0
    %209 = vmatprep.subr.mxu0 0.0
    %210 = vmatpush1.msra.mxu0 0.0
    %211 = vmatprep.subr.mxu0 0.0
    %212 = vmatpush1.msra.mxu0 0.0
    %213 = vmatprep.subr.mxu0 0.0
    %214 = vmatpush1.msra.mxu0 0.0
    %215 = vmatprep.subr.mxu0 0.0
    %216 = vmatpush1.msra.mxu0 0.0
    %217 = vmatprep.subr.mxu0 0.0
    %218 = vmatpush1.msra.mxu0 0.0
    %219 = vmatprep.subr.mxu0 0.0
    %220 = vmatpush1.msra.mxu0 0.0
    %221 = vmatprep.subr.mxu0 0.0
    %222 = vmatpush1.msra.mxu0 0.0
    %223 = vmatprep.subr.mxu0 0.0
    %224 = vmatpush1.msra.mxu0 0.0
    %225 = vmatprep.subr.mxu0 0.0
    %226 = vmatpush1.msra.mxu0 0.0
    %227 = vmatprep.subr.mxu0 0.0
    %228 = vmatpush1.msra.mxu0 0.0
    %229 = vmatprep.subr.mxu0 0.0
    %230 = vmatpush1.msra.mxu0 0.0
    %231 = vmatprep.subr.mxu0 0.0
    %232 = vmatpush1.msra.mxu0 0.0
    %233 = vmatprep.subr.mxu0 0.0
    %234 = vmatpush1.msra.mxu0 0.0
    %235 = vmatprep.subr.mxu0 0.0
    %236 = vmatpush1.msra.mxu0 0.0
    %237 = vmatprep.subr.mxu0 0.0
    %238 = vmatpush1.msra.mxu0 0.0
    %239 = vmatprep.subr.mxu0 0.0
    %240 = vmatpush1.msra.mxu0 0.0
    %241 = vmatprep.subr.mxu0 0.0
    %242 = vmatpush1.msra.mxu0 0.0
    %243 = vmatprep.subr.mxu0 0.0
    %244 = vmatpush1.msra.mxu0 0.0
    %245 = vmatprep.subr.mxu0 0.0
    %246 = vmatpush1.msra.mxu0 0.0
    %247 = vmatprep.subr.mxu0 0.0
    %248 = vmatpush1.msra.mxu0 0.0
    %249 = vmatprep.subr.mxu0 0.0
    %250 = vmatpush1.msra.mxu0 0.0
    %251 = vmatprep.mubr.f32.mxu0 0.0
    %252 = vmatmul.mubr.f32.gmra.mrb[0].mxu0 %v185
    %v253 = vpop.f32.mrb[0].mxu0
    %v254 = vadd.f32 0.0, %v253
    %v255 = vpop.f32.mrb[0].mxu0
    %256 = vdwg.mxu0
    %v257 = vadd.f32 %v175, %v254
    %v258 = vxor.u32 %v257, 2147483648
    %v259 = vmul.f32 %v258, 1.442695
    %v260 = vpow.pop %v259
    %v261 = vadd.f32 %v260, 1.0
    %v262 = vrcp.pop %v261
    %v263 = vmul.f32 1.0, %v262
    %v264 = vtanh.pop %v257
    %v265 = vmul.f32 %v263, 0.0
    %267 = vrot.lane.b32.xlu0 %v264, 64
    %v268 = vpop.permute.xlu0 %267
    %v270 = vmul.f32 %v263, %v268
    %272 = vrot.lane.b32.xlu0 %v270, 32
    %v273 = vpop.permute.xlu0 %272
    %v275 = vadd.f32 %v265, %v273
    %v276 = vtanh.pop %v275
    %278 = vrot.lane.b32.xlu0 %v276, 64
    %v279 = vpop.permute.xlu0 %278
    %v281 = vmul.f32 %v263, %v279
    %283 = vrot.lane.b32.xlu0 %v281, 32
    %v284 = vpop.permute.xlu0 %283
    %v285 = vsel %vm183, %v284, 0
    %287 = vmatprep.subr.mxu0 0.0
    %288 = vmatpush1.msra.mxu0 %v90
    %289 = vmatprep.subr.mxu0 0.0
    %290 = vmatpush1.msra.mxu0 %v91
    %291 = vmatprep.subr.mxu0 0.0
    %292 = vmatpush1.msra.mxu0 %v92
    %293 = vmatprep.subr.mxu0 0.0
    %294 = vmatpush1.msra.mxu0 %v93
    %295 = vmatprep.subr.mxu0 0.0
    %296 = vmatpush1.msra.mxu0 0.0
    %297 = vmatprep.subr.mxu0 0.0
    %298 = vmatpush1.msra.mxu0 0.0
    %299 = vmatprep.subr.mxu0 0.0
    %300 = vmatpush1.msra.mxu0 0.0
    %301 = vmatprep.subr.mxu0 0.0
    %302 = vmatpush1.msra.mxu0 0.0
    %303 = vmatprep.subr.mxu0 0.0
    %304 = vmatpush1.msra.mxu0 0.0
    %305 = vmatprep.subr.mxu0 0.0
    %306 = vmatpush1.msra.mxu0 0.0
    %307 = vmatprep.subr.mxu0 0.0
    %308 = vmatpush1.msra.mxu0 0.0
    %309 = vmatprep.subr.mxu0 0.0
    %310 = vmatpush1.msra.mxu0 0.0
    %311 = vmatprep.subr.mxu0 0.0
    %312 = vmatpush1.msra.mxu0 0.0
    %313 = vmatprep.subr.mxu0 0.0
    %314 = vmatpush1.msra.mxu0 0.0
    %315 = vmatprep.subr.mxu0 0.0
    %316 = vmatpush1.msra.mxu0 0.0
    %317 = vmatprep.subr.mxu0 0.0
    %318 = vmatpush1.msra.mxu0 0.0
    %319 = vmatprep.subr.mxu0 0.0
    %320 = vmatpush1.msra.mxu0 0.0
    %321 = vmatprep.subr.mxu0 0.0
    %322 = vmatpush1.msra.mxu0 0.0
    %323 = vmatprep.subr.mxu0 0.0
    %324 = vmatpush1.msra.mxu0 0.0
    %325 = vmatprep.subr.mxu0 0.0
    %326 = vmatpush1.msra.mxu0 0.0
    %327 = vmatprep.subr.mxu0 0.0
    %328 = vmatpush1.msra.mxu0 0.0
    %329 = vmatprep.subr.mxu0 0.0
    %330 = vmatpush1.msra.mxu0 0.0
    %331 = vmatprep.subr.mxu0 0.0
    %332 = vmatpush1.msra.mxu0 0.0
    %333 = vmatprep.subr.mxu0 0.0
    %334 = vmatpush1.msra.mxu0 0.0
    %335 = vmatprep.subr.mxu0 0.0
    %336 = vmatpush1.msra.mxu0 0.0
    %337 = vmatprep.subr.mxu0 0.0
    %338 = vmatpush1.msra.mxu0 0.0
    %339 = vmatprep.subr.mxu0 0.0
    %340 = vmatpush1.msra.mxu0 0.0
    %341 = vmatprep.subr.mxu0 0.0
    %342 = vmatpush1.msra.mxu0 0.0
    %343 = vmatprep.subr.mxu0 0.0
    %344 = vmatpush1.msra.mxu0 0.0
    %345 = vmatprep.subr.mxu0 0.0
    %346 = vmatpush1.msra.mxu0 0.0
    %347 = vmatprep.subr.mxu0 0.0
    %348 = vmatpush1.msra.mxu0 0.0
    %349 = vmatprep.subr.mxu0 0.0
    %350 = vmatpush1.msra.mxu0 0.0
    %351 = vmatprep.mubr.f32.mxu0 0.0
    %352 = vmatmul.mubr.f32.gmra.mrb[0].mxu0 %v285
    %v353 = vpop.f32.mrb[0].mxu0
    %v354 = vadd.f32 0.0, %v353
    %v355 = vpop.f32.mrb[0].mxu0
    %356 = vdwg.mxu0
    %v358 = vrot.slane %v354, 6
    %v360 = vadd.f32 %v175, %v358
    %v361 = vxor.u32 %v360, 2147483648
    %v362 = vmul.f32 %v361, 1.442695
    %v363 = vpow.pop %v362
    %v364 = vadd.f32 %v363, 1.0
    %v365 = vrcp.pop %v364
    %v366 = vmul.f32 1.0, %v365
    %v367 = vtanh.pop %v360
    %v369 = vrot.slane %v275, 6
    %v371 = vmul.f32 %v366, %v369
    %373 = vrot.lane.b32.xlu0 %v367, 64
    %v374 = vpop.permute.xlu0 %373
    %v376 = vmul.f32 %v366, %v374
    %378 = vrot.lane.b32.xlu0 %v376, 32
    %v379 = vpop.permute.xlu0 %378
    %v381 = vadd.f32 %v371, %v379
    %v382 = vtanh.pop %v381
    %384 = vrot.lane.b32.xlu0 %v382, 64
    %v385 = vpop.permute.xlu0 %384
    %v387 = vmul.f32 %v366, %v385
    %v389 = vrot.slane %v387, 2
    %390 = vrot.lane.b32.xlu0 %v389, 32
    %v391 = vpop.permute.xlu0 %390
    %v392 = vsel %vm183, %v391, 0
    %394 = vmatprep.subr.mxu0 0.0
    %395 = vmatpush1.msra.mxu0 %v90
    %396 = vmatprep.subr.mxu0 0.0
    %397 = vmatpush1.msra.mxu0 %v91
    %398 = vmatprep.subr.mxu0 0.0
    %399 = vmatpush1.msra.mxu0 %v92
    %400 = vmatprep.subr.mxu0 0.0
    %401 = vmatpush1.msra.mxu0 %v93
    %402 = vmatprep.subr.mxu0 0.0
    %403 = vmatpush1.msra.mxu0 0.0
    %404 = vmatprep.subr.mxu0 0.0
    %405 = vmatpush1.msra.mxu0 0.0
    %406 = vmatprep.subr.mxu0 0.0
    %407 = vmatpush1.msra.mxu0 0.0
    %408 = vmatprep.subr.mxu0 0.0
    %409 = vmatpush1.msra.mxu0 0.0
    %410 = vmatprep.subr.mxu0 0.0
    %411 = vmatpush1.msra.mxu0 0.0
    %412 = vmatprep.subr.mxu0 0.0
    %413 = vmatpush1.msra.mxu0 0.0
    %414 = vmatprep.subr.mxu0 0.0
    %415 = vmatpush1.msra.mxu0 0.0
    %416 = vmatprep.subr.mxu0 0.0
    %417 = vmatpush1.msra.mxu0 0.0
    %418 = vmatprep.subr.mxu0 0.0
    %419 = vmatpush1.msra.mxu0 0.0
    %420 = vmatprep.subr.mxu0 0.0
    %421 = vmatpush1.msra.mxu0 0.0
    %422 = vmatprep.subr.mxu0 0.0
    %423 = vmatpush1.msra.mxu0 0.0
    %424 = vmatprep.subr.mxu0 0.0
    %425 = vmatpush1.msra.mxu0 0.0
    %426 = vmatprep.subr.mxu0 0.0
    %427 = vmatpush1.msra.mxu0 0.0
    %428 = vmatprep.subr.mxu0 0.0
    %429 = vmatpush1.msra.mxu0 0.0
    %430 = vmatprep.subr.mxu0 0.0
    %431 = vmatpush1.msra.mxu0 0.0
    %432 = vmatprep.subr.mxu0 0.0
    %433 = vmatpush1.msra.mxu0 0.0
    %434 = vmatprep.subr.mxu0 0.0
    %435 = vmatpush1.msra.mxu0 0.0
    %436 = vmatprep.subr.mxu0 0.0
    %437 = vmatpush1.msra.mxu0 0.0
    %438 = vmatprep.subr.mxu0 0.0
    %439 = vmatpush1.msra.mxu0 0.0
    %440 = vmatprep.subr.mxu0 0.0
    %441 = vmatpush1.msra.mxu0 0.0
    %442 = vmatprep.subr.mxu0 0.0
    %443 = vmatpush1.msra.mxu0 0.0
    %444 = vmatprep.subr.mxu0 0.0
    %445 = vmatpush1.msra.mxu0 0.0
    %446 = vmatprep.subr.mxu0 0.0
    %447 = vmatpush1.msra.mxu0 0.0
    %448 = vmatprep.subr.mxu0 0.0
    %449 = vmatpush1.msra.mxu0 0.0
    %450 = vmatprep.subr.mxu0 0.0
    %451 = vmatpush1.msra.mxu0 0.0
    %452 = vmatprep.subr.mxu0 0.0
    %453 = vmatpush1.msra.mxu0 0.0
    %454 = vmatprep.subr.mxu0 0.0
    %455 = vmatpush1.msra.mxu0 0.0
    %456 = vmatprep.subr.mxu0 0.0
    %457 = vmatpush1.msra.mxu0 0.0
    %458 = vmatprep.mubr.f32.mxu0 0.0
    %459 = vmatmul.mubr.f32.gmra.mrb[0].mxu0 %v392
    %v460 = vpop.f32.mrb[0].mxu0
    %v461 = vadd.f32 0.0, %v460
    %v462 = vpop.f32.mrb[0].mxu0
    %463 = vdwg.mxu0
    %v465 = vrot.slane %v461, 4
    %v467 = vadd.f32 %v175, %v465
    %v468 = vxor.u32 %v467, 2147483648
    %v469 = vmul.f32 %v468, 1.442695
    %v470 = vpow.pop %v469
    %v471 = vadd.f32 %v470, 1.0
    %v472 = vrcp.pop %v471
    %v473 = vmul.f32 1.0, %v472
    %v474 = vtanh.pop %v467
    %v476 = vrot.slane %v381, 6
    %v478 = vmul.f32 %v473, %v476
    %480 = vrot.lane.b32.xlu0 %v474, 64
    %v481 = vpop.permute.xlu0 %480
    %v483 = vmul.f32 %v473, %v481
    %485 = vrot.lane.b32.xlu0 %v483, 32
    %v486 = vpop.permute.xlu0 %485
    %v488 = vadd.f32 %v478, %v486
    %v489 = vtanh.pop %v488
    %491 = vrot.lane.b32.xlu0 %v489, 64
    %v492 = vpop.permute.xlu0 %491
    %v494 = vmul.f32 %v473, %v492
    %v496 = vrot.slane %v494, 4
    %497 = vrot.lane.b32.xlu0 %v496, 32
    %v498 = vpop.permute.xlu0 %497
    %v499 = vsel %vm183, %v498, 0
    %501 = vmatprep.subr.mxu0 0.0
    %502 = vmatpush1.msra.mxu0 %v90
    %503 = vmatprep.subr.mxu0 0.0
    %504 = vmatpush1.msra.mxu0 %v91
    %505 = vmatprep.subr.mxu0 0.0
    %506 = vmatpush1.msra.mxu0 %v92
    %507 = vmatprep.subr.mxu0 0.0
    %508 = vmatpush1.msra.mxu0 %v93
    %509 = vmatprep.subr.mxu0 0.0
    %510 = vmatpush1.msra.mxu0 0.0
    %511 = vmatprep.subr.mxu0 0.0
    %512 = vmatpush1.msra.mxu0 0.0
    %513 = vmatprep.subr.mxu0 0.0
    %514 = vmatpush1.msra.mxu0 0.0
    %515 = vmatprep.subr.mxu0 0.0
    %516 = vmatpush1.msra.mxu0 0.0
    %517 = vmatprep.subr.mxu0 0.0
    %518 = vmatpush1.msra.mxu0 0.0
    %519 = vmatprep.subr.mxu0 0.0
    %520 = vmatpush1.msra.mxu0 0.0
    %521 = vmatprep.subr.mxu0 0.0
    %522 = vmatpush1.msra.mxu0 0.0
    %523 = vmatprep.subr.mxu0 0.0
    %524 = vmatpush1.msra.mxu0 0.0
    %525 = vmatprep.subr.mxu0 0.0
    %526 = vmatpush1.msra.mxu0 0.0
    %527 = vmatprep.subr.mxu0 0.0
    %528 = vmatpush1.msra.mxu0 0.0
    %529 = vmatprep.subr.mxu0 0.0
    %530 = vmatpush1.msra.mxu0 0.0
    %531 = vmatprep.subr.mxu0 0.0
    %532 = vmatpush1.msra.mxu0 0.0
    %533 = vmatprep.subr.mxu0 0.0
    %534 = vmatpush1.msra.mxu0 0.0
    %535 = vmatprep.subr.mxu0 0.0
    %536 = vmatpush1.msra.mxu0 0.0
    %537 = vmatprep.subr.mxu0 0.0
    %538 = vmatpush1.msra.mxu0 0.0
    %539 = vmatprep.subr.mxu0 0.0
    %540 = vmatpush1.msra.mxu0 0.0
    %541 = vmatprep.subr.mxu0 0.0
    %542 = vmatpush1.msra.mxu0 0.0
    %543 = vmatprep.subr.mxu0 0.0
    %544 = vmatpush1.msra.mxu0 0.0
    %545 = vmatprep.subr.mxu0 0.0
    %546 = vmatpush1.msra.mxu0 0.0
    %547 = vmatprep.subr.mxu0 0.0
    %548 = vmatpush1.msra.mxu0 0.0
    %549 = vmatprep.subr.mxu0 0.0
    %550 = vmatpush1.msra.mxu0 0.0
    %551 = vmatprep.subr.mxu0 0.0
    %552 = vmatpush1.msra.mxu0 0.0
    %553 = vmatprep.subr.mxu0 0.0
    %554 = vmatpush1.msra.mxu0 0.0
    %555 = vmatprep.subr.mxu0 0.0
    %556 = vmatpush1.msra.mxu0 0.0
    %557 = vmatprep.subr.mxu0 0.0
    %558 = vmatpush1.msra.mxu0 0.0
    %559 = vmatprep.subr.mxu0 0.0
    %560 = vmatpush1.msra.mxu0 0.0
    %561 = vmatprep.subr.mxu0 0.0
    %562 = vmatpush1.msra.mxu0 0.0
    %563 = vmatprep.subr.mxu0 0.0
    %564 = vmatpush1.msra.mxu0 0.0
    %565 = vmatprep.mubr.f32.mxu0 0.0
    %566 = vmatmul.mubr.f32.gmra.mrb[0].mxu0 %v499
    %v567 = vpop.f32.mrb[0].mxu0
    %v568 = vadd.f32 0.0, %v567
    %v569 = vpop.f32.mrb[0].mxu0
    %570 = vdwg.mxu0
    %v572 = vrot.slane %v568, 2
    %v574 = vadd.f32 %v175, %v572
    %v575 = vxor.u32 %v574, 2147483648
    %v576 = vmul.f32 %v575, 1.442695
    %v577 = vpow.pop %v576
    %v578 = vadd.f32 %v577, 1.0
    %v579 = vrcp.pop %v578
    %v580 = vmul.f32 1.0, %v579
    %v581 = vtanh.pop %v574
    %v583 = vrot.slane %v488, 6
    %v585 = vmul.f32 %v580, %v583
    %587 = vrot.lane.b32.xlu0 %v581, 64
    %v588 = vpop.permute.xlu0 %587
    %v590 = vmul.f32 %v580, %v588
    %592 = vrot.lane.b32.xlu0 %v590, 32
    %v593 = vpop.permute.xlu0 %592
    %v595 = vadd.f32 %v585, %v593
    %v596 = vtanh.pop %v595
    %598 = vrot.lane.b32.xlu0 %v596, 64
    %v599 = vpop.permute.xlu0 %598
    %v601 = vmul.f32 %v580, %v599
    %v603 = vrot.slane %v601, 6
    %604 = vrot.lane.b32.xlu0 %v603, 32
    %v605 = vpop.permute.xlu0 %604
    %v606 = vsel %vm183, %v605, 0
    %608 = vmatprep.subr.mxu0 0.0
    %609 = vmatpush1.msra.mxu0 %v90
    %610 = vmatprep.subr.mxu0 0.0
    %611 = vmatpush1.msra.mxu0 %v91
    %612 = vmatprep.subr.mxu0 0.0
    %613 = vmatpush1.msra.mxu0 %v92
    %614 = vmatprep.subr.mxu0 0.0
    %615 = vmatpush1.msra.mxu0 %v93
    %616 = vmatprep.subr.mxu0 0.0
    %617 = vmatpush1.msra.mxu0 0.0
    %618 = vmatprep.subr.mxu0 0.0
    %619 = vmatpush1.msra.mxu0 0.0
    %620 = vmatprep.subr.mxu0 0.0
    %621 = vmatpush1.msra.mxu0 0.0
    %622 = vmatprep.subr.mxu0 0.0
    %623 = vmatpush1.msra.mxu0 0.0
    %624 = vmatprep.subr.mxu0 0.0
    %625 = vmatpush1.msra.mxu0 0.0
    %626 = vmatprep.subr.mxu0 0.0
    %627 = vmatpush1.msra.mxu0 0.0
    %628 = vmatprep.subr.mxu0 0.0
    %629 = vmatpush1.msra.mxu0 0.0
    %630 = vmatprep.subr.mxu0 0.0
    %631 = vmatpush1.msra.mxu0 0.0
    %632 = vmatprep.subr.mxu0 0.0
    %633 = vmatpush1.msra.mxu0 0.0
    %634 = vmatprep.subr.mxu0 0.0
    %635 = vmatpush1.msra.mxu0 0.0
    %636 = vmatprep.subr.mxu0 0.0
    %637 = vmatpush1.msra.mxu0 0.0
    %638 = vmatprep.subr.mxu0 0.0
    %639 = vmatpush1.msra.mxu0 0.0
    %640 = vmatprep.subr.mxu0 0.0
    %641 = vmatpush1.msra.mxu0 0.0
    %642 = vmatprep.subr.mxu0 0.0
    %643 = vmatpush1.msra.mxu0 0.0
    %644 = vmatprep.subr.mxu0 0.0
    %645 = vmatpush1.msra.mxu0 0.0
    %646 = vmatprep.subr.mxu0 0.0
    %647 = vmatpush1.msra.mxu0 0.0
    %648 = vmatprep.subr.mxu0 0.0
    %649 = vmatpush1.msra.mxu0 0.0
    %650 = vmatprep.subr.mxu0 0.0
    %651 = vmatpush1.msra.mxu0 0.0
    %652 = vmatprep.subr.mxu0 0.0
    %653 = vmatpush1.msra.mxu0 0.0
    %654 = vmatprep.subr.mxu0 0.0
    %655 = vmatpush1.msra.mxu0 0.0
    %656 = vmatprep.subr.mxu0 0.0
    %657 = vmatpush1.msra.mxu0 0.0
    %658 = vmatprep.subr.mxu0 0.0
    %659 = vmatpush1.msra.mxu0 0.0
    %660 = vmatprep.subr.mxu0 0.0
    %661 = vmatpush1.msra.mxu0 0.0
    %662 = vmatprep.subr.mxu0 0.0
    %663 = vmatpush1.msra.mxu0 0.0
    %664 = vmatprep.subr.mxu0 0.0
    %665 = vmatpush1.msra.mxu0 0.0
    %666 = vmatprep.subr.mxu0 0.0
    %667 = vmatpush1.msra.mxu0 0.0
    %668 = vmatprep.subr.mxu0 0.0
    %669 = vmatpush1.msra.mxu0 0.0
    %670 = vmatprep.subr.mxu0 0.0
    %671 = vmatpush1.msra.mxu0 0.0
    %672 = vmatprep.mubr.f32.mxu0 0.0
    %673 = vmatmul.mubr.f32.gmra.mrb[0].mxu0 %v606
    %v674 = vpop.f32.mrb[0].mxu0
    %v675 = vadd.f32 0.0, %v674
    %v676 = vpop.f32.mrb[0].mxu0
    %677 = vdwg.mxu0
    %v678 = vadd.f32 %v180, %v675
    %v679 = vxor.u32 %v678, 2147483648
    %v680 = vmul.f32 %v679, 1.442695
    %v681 = vpow.pop %v680
    %v682 = vadd.f32 %v681, 1.0
    %v683 = vrcp.pop %v682
    %v684 = vmul.f32 1.0, %v683
    %v685 = vtanh.pop %v678
    %v687 = vrot.slane %v595, 6
    %v689 = vmul.f32 %v684, %v687
    %691 = vrot.lane.b32.xlu0 %v685, 64
    %v692 = vpop.permute.xlu0 %691
    %v694 = vmul.f32 %v684, %v692
    %696 = vrot.lane.b32.xlu0 %v694, 32
    %v697 = vpop.permute.xlu0 %696
    %v699 = vadd.f32 %v689, %v697
    %v700 = vtanh.pop %v699
    %702 = vrot.lane.b32.xlu0 %v700, 64
    %v703 = vpop.permute.xlu0 %702
    %v705 = vmul.f32 %v684, %v703
    %707 = vrot.lane.b32.xlu0 %v705, 32
    %v708 = vpop.permute.xlu0 %707
    %v709 = vsel %vm183, %v708, 0
    %711 = vmatprep.subr.mxu0 0.0
    %712 = vmatpush1.msra.mxu0 %v90
    %713 = vmatprep.subr.mxu0 0.0
    %714 = vmatpush1.msra.mxu0 %v91
    %715 = vmatprep.subr.mxu0 0.0
    %716 = vmatpush1.msra.mxu0 %v92
    %717 = vmatprep.subr.mxu0 0.0
    %718 = vmatpush1.msra.mxu0 %v93
    %719 = vmatprep.subr.mxu0 0.0
    %720 = vmatpush1.msra.mxu0 0.0
    %721 = vmatprep.subr.mxu0 0.0
    %722 = vmatpush1.msra.mxu0 0.0
    %723 = vmatprep.subr.mxu0 0.0
    %724 = vmatpush1.msra.mxu0 0.0
    %725 = vmatprep.subr.mxu0 0.0
    %726 = vmatpush1.msra.mxu0 0.0
    %727 = vmatprep.subr.mxu0 0.0
    %728 = vmatpush1.msra.mxu0 0.0
    %729 = vmatprep.subr.mxu0 0.0
    %730 = vmatpush1.msra.mxu0 0.0
    %731 = vmatprep.subr.mxu0 0.0
    %732 = vmatpush1.msra.mxu0 0.0
    %733 = vmatprep.subr.mxu0 0.0
    %734 = vmatpush1.msra.mxu0 0.0
    %735 = vmatprep.subr.mxu0 0.0
    %736 = vmatpush1.msra.mxu0 0.0
    %737 = vmatprep.subr.mxu0 0.0
    %738 = vmatpush1.msra.mxu0 0.0
    %739 = vmatprep.subr.mxu0 0.0
    %740 = vmatpush1.msra.mxu0 0.0
    %741 = vmatprep.subr.mxu0 0.0
    %742 = vmatpush1.msra.mxu0 0.0
    %743 = vmatprep.subr.mxu0 0.0
    %744 = vmatpush1.msra.mxu0 0.0
    %745 = vmatprep.subr.mxu0 0.0
    %746 = vmatpush1.msra.mxu0 0.0
    %747 = vmatprep.subr.mxu0 0.0
    %748 = vmatpush1.msra.mxu0 0.0
    %749 = vmatprep.subr.mxu0 0.0
    %750 = vmatpush1.msra.mxu0 0.0
    %751 = vmatprep.subr.mxu0 0.0
    %752 = vmatpush1.msra.mxu0 0.0
    %753 = vmatprep.subr.mxu0 0.0
    %754 = vmatpush1.msra.mxu0 0.0
    %755 = vmatprep.subr.mxu0 0.0
    %756 = vmatpush1.msra.mxu0 0.0
    %757 = vmatprep.subr.mxu0 0.0
    %758 = vmatpush1.msra.mxu0 0.0
    %759 = vmatprep.subr.mxu0 0.0
    %760 = vmatpush1.msra.mxu0 0.0
    %761 = vmatprep.subr.mxu0 0.0
    %762 = vmatpush1.msra.mxu0 0.0
    %763 = vmatprep.subr.mxu0 0.0
    %764 = vmatpush1.msra.mxu0 0.0
    %765 = vmatprep.subr.mxu0 0.0
    %766 = vmatpush1.msra.mxu0 0.0
    %767 = vmatprep.subr.mxu0 0.0
    %768 = vmatpush1.msra.mxu0 0.0
    %769 = vmatprep.subr.mxu0 0.0
    %770 = vmatpush1.msra.mxu0 0.0
    %771 = vmatprep.subr.mxu0 0.0
    %772 = vmatpush1.msra.mxu0 0.0
    %773 = vmatprep.subr.mxu0 0.0
    %774 = vmatpush1.msra.mxu0 0.0
    %775 = vmatprep.mubr.f32.mxu0 0.0
    %776 = vmatmul.mubr.f32.gmra.mrb[0].mxu0 %v709
    %v777 = vpop.f32.mrb[0].mxu0
    %v778 = vadd.f32 0.0, %v777
    %v779 = vpop.f32.mrb[0].mxu0
    %780 = vdwg.mxu0
    %v782 = vrot.slane %v778, 6
    %v784 = vadd.f32 %v180, %v782
    %v785 = vxor.u32 %v784, 2147483648
    %v786 = vmul.f32 %v785, 1.442695
    %v787 = vpow.pop %v786
    %v788 = vadd.f32 %v787, 1.0
    %v789 = vrcp.pop %v788
    %v790 = vmul.f32 1.0, %v789
    %v791 = vtanh.pop %v784
    %v793 = vrot.slane %v699, 6
    %v795 = vmul.f32 %v790, %v793
    %797 = vrot.lane.b32.xlu0 %v791, 64
    %v798 = vpop.permute.xlu0 %797
    %v800 = vmul.f32 %v790, %v798
    %802 = vrot.lane.b32.xlu0 %v800, 32
    %v803 = vpop.permute.xlu0 %802
    %v805 = vadd.f32 %v795, %v803
    %v806 = vtanh.pop %v805
    %808 = vrot.lane.b32.xlu0 %v806, 64
    %v809 = vpop.permute.xlu0 %808
    %v811 = vmul.f32 %v790, %v809
    %v813 = vrot.slane %v811, 2
    %814 = vrot.lane.b32.xlu0 %v813, 32
    %v815 = vpop.permute.xlu0 %814
    %v816 = vsel %vm183, %v815, 0
    %818 = vmatprep.subr.mxu0 0.0
    %819 = vmatpush1.msra.mxu0 %v90
    %820 = vmatprep.subr.mxu0 0.0
    %821 = vmatpush1.msra.mxu0 %v91
    %822 = vmatprep.subr.mxu0 0.0
    %823 = vmatpush1.msra.mxu0 %v92
    %824 = vmatprep.subr.mxu0 0.0
    %825 = vmatpush1.msra.mxu0 %v93
    %826 = vmatprep.subr.mxu0 0.0
    %827 = vmatpush1.msra.mxu0 0.0
    %828 = vmatprep.subr.mxu0 0.0
    %829 = vmatpush1.msra.mxu0 0.0
    %830 = vmatprep.subr.mxu0 0.0
    %831 = vmatpush1.msra.mxu0 0.0
    %832 = vmatprep.subr.mxu0 0.0
    %833 = vmatpush1.msra.mxu0 0.0
    %834 = vmatprep.subr.mxu0 0.0
    %835 = vmatpush1.msra.mxu0 0.0
    %836 = vmatprep.subr.mxu0 0.0
    %837 = vmatpush1.msra.mxu0 0.0
    %838 = vmatprep.subr.mxu0 0.0
    %839 = vmatpush1.msra.mxu0 0.0
    %840 = vmatprep.subr.mxu0 0.0
    %841 = vmatpush1.msra.mxu0 0.0
    %842 = vmatprep.subr.mxu0 0.0
    %843 = vmatpush1.msra.mxu0 0.0
    %844 = vmatprep.subr.mxu0 0.0
    %845 = vmatpush1.msra.mxu0 0.0
    %846 = vmatprep.subr.mxu0 0.0
    %847 = vmatpush1.msra.mxu0 0.0
    %848 = vmatprep.subr.mxu0 0.0
    %849 = vmatpush1.msra.mxu0 0.0
    %850 = vmatprep.subr.mxu0 0.0
    %851 = vmatpush1.msra.mxu0 0.0
    %852 = vmatprep.subr.mxu0 0.0
    %853 = vmatpush1.msra.mxu0 0.0
    %854 = vmatprep.subr.mxu0 0.0
    %855 = vmatpush1.msra.mxu0 0.0
    %856 = vmatprep.subr.mxu0 0.0
    %857 = vmatpush1.msra.mxu0 0.0
    %858 = vmatprep.subr.mxu0 0.0
    %859 = vmatpush1.msra.mxu0 0.0
    %860 = vmatprep.subr.mxu0 0.0
    %861 = vmatpush1.msra.mxu0 0.0
    %862 = vmatprep.subr.mxu0 0.0
    %863 = vmatpush1.msra.mxu0 0.0
    %864 = vmatprep.subr.mxu0 0.0
    %865 = vmatpush1.msra.mxu0 0.0
    %866 = vmatprep.subr.mxu0 0.0
    %867 = vmatpush1.msra.mxu0 0.0
    %868 = vmatprep.subr.mxu0 0.0
    %869 = vmatpush1.msra.mxu0 0.0
    %870 = vmatprep.subr.mxu0 0.0
    %871 = vmatpush1.msra.mxu0 0.0
    %872 = vmatprep.subr.mxu0 0.0
    %873 = vmatpush1.msra.mxu0 0.0
    %874 = vmatprep.subr.mxu0 0.0
    %875 = vmatpush1.msra.mxu0 0.0
    %876 = vmatprep.subr.mxu0 0.0
    %877 = vmatpush1.msra.mxu0 0.0
    %878 = vmatprep.subr.mxu0 0.0
    %879 = vmatpush1.msra.mxu0 0.0
    %880 = vmatprep.subr.mxu0 0.0
    %881 = vmatpush1.msra.mxu0 0.0
    %882 = vmatprep.mubr.f32.mxu0 0.0
    %883 = vmatmul.mubr.f32.gmra.mrb[0].mxu0 %v816
    %v884 = vpop.f32.mrb[0].mxu0
    %v885 = vadd.f32 0.0, %v884
    %v886 = vpop.f32.mrb[0].mxu0
    %887 = vdwg.mxu0
    %v889 = vrot.slane %v885, 4
    %v891 = vadd.f32 %v180, %v889
    %v892 = vxor.u32 %v891, 2147483648
    %v893 = vmul.f32 %v892, 1.442695
    %v894 = vpow.pop %v893
    %v895 = vadd.f32 %v894, 1.0
    %v896 = vrcp.pop %v895
    %v897 = vmul.f32 1.0, %v896
    %v898 = vtanh.pop %v891
    %v900 = vrot.slane %v805, 6
    %v902 = vmul.f32 %v897, %v900
    %904 = vrot.lane.b32.xlu0 %v898, 64
    %v905 = vpop.permute.xlu0 %904
    %v907 = vmul.f32 %v897, %v905
    %909 = vrot.lane.b32.xlu0 %v907, 32
    %v910 = vpop.permute.xlu0 %909
    %v912 = vadd.f32 %v902, %v910
    %v913 = vtanh.pop %v912
    %915 = vrot.lane.b32.xlu0 %v913, 64
    %v916 = vpop.permute.xlu0 %915
    %v918 = vmul.f32 %v897, %v916
    %v920 = vrot.slane %v918, 4
    %921 = vrot.lane.b32.xlu0 %v920, 32
    %v922 = vpop.permute.xlu0 %921
    %v923 = vsel %vm183, %v922, 0
    %925 = vmatprep.subr.mxu0 0.0
    %926 = vmatpush1.msra.mxu0 %v90
    %927 = vmatprep.subr.mxu0 0.0
    %928 = vmatpush1.msra.mxu0 %v91
    %929 = vmatprep.subr.mxu0 0.0
    %930 = vmatpush1.msra.mxu0 %v92
    %931 = vmatprep.subr.mxu0 0.0
    %932 = vmatpush1.msra.mxu0 %v93
    %933 = vmatprep.subr.mxu0 0.0
    %934 = vmatpush1.msra.mxu0 0.0
    %935 = vmatprep.subr.mxu0 0.0
    %936 = vmatpush1.msra.mxu0 0.0
    %937 = vmatprep.subr.mxu0 0.0
    %938 = vmatpush1.msra.mxu0 0.0
    %939 = vmatprep.subr.mxu0 0.0
    %940 = vmatpush1.msra.mxu0 0.0
    %941 = vmatprep.subr.mxu0 0.0
    %942 = vmatpush1.msra.mxu0 0.0
    %943 = vmatprep.subr.mxu0 0.0
    %944 = vmatpush1.msra.mxu0 0.0
    %945 = vmatprep.subr.mxu0 0.0
    %946 = vmatpush1.msra.mxu0 0.0
    %947 = vmatprep.subr.mxu0 0.0
    %948 = vmatpush1.msra.mxu0 0.0
    %949 = vmatprep.subr.mxu0 0.0
    %950 = vmatpush1.msra.mxu0 0.0
    %951 = vmatprep.subr.mxu0 0.0
    %952 = vmatpush1.msra.mxu0 0.0
    %953 = vmatprep.subr.mxu0 0.0
    %954 = vmatpush1.msra.mxu0 0.0
    %955 = vmatprep.subr.mxu0 0.0
    %956 = vmatpush1.msra.mxu0 0.0
    %957 = vmatprep.subr.mxu0 0.0
    %958 = vmatpush1.msra.mxu0 0.0
    %959 = vmatprep.subr.mxu0 0.0
    %960 = vmatpush1.msra.mxu0 0.0
    %961 = vmatprep.subr.mxu0 0.0
    %962 = vmatpush1.msra.mxu0 0.0
    %963 = vmatprep.subr.mxu0 0.0
    %964 = vmatpush1.msra.mxu0 0.0
    %965 = vmatprep.subr.mxu0 0.0
    %966 = vmatpush1.msra.mxu0 0.0
    %967 = vmatprep.subr.mxu0 0.0
    %968 = vmatpush1.msra.mxu0 0.0
    %969 = vmatprep.subr.mxu0 0.0
    %970 = vmatpush1.msra.mxu0 0.0
    %971 = vmatprep.subr.mxu0 0.0
    %972 = vmatpush1.msra.mxu0 0.0
    %973 = vmatprep.subr.mxu0 0.0
    %974 = vmatpush1.msra.mxu0 0.0
    %975 = vmatprep.subr.mxu0 0.0
    %976 = vmatpush1.msra.mxu0 0.0
    %977 = vmatprep.subr.mxu0 0.0
    %978 = vmatpush1.msra.mxu0 0.0
    %979 = vmatprep.subr.mxu0 0.0
    %980 = vmatpush1.msra.mxu0 0.0
    %981 = vmatprep.subr.mxu0 0.0
    %982 = vmatpush1.msra.mxu0 0.0
    %983 = vmatprep.subr.mxu0 0.0
    %984 = vmatpush1.msra.mxu0 0.0
    %985 = vmatprep.subr.mxu0 0.0
    %986 = vmatpush1.msra.mxu0 0.0
    %987 = vmatprep.subr.mxu0 0.0
    %988 = vmatpush1.msra.mxu0 0.0
    %989 = vmatprep.mubr.f32.mxu0 0.0
    %990 = vmatmul.mubr.f32.gmra.mrb[0].mxu0 %v923
    %v991 = vpop.f32.mrb[0].mxu0
    %v992 = vadd.f32 0.0, %v991
    %v993 = vpop.f32.mrb[0].mxu0
    %994 = vdwg.mxu0
    %v996 = vrot.slane %v992, 2
    %v998 = vadd.f32 %v180, %v996
    %v999 = vxor.u32 %v998, 2147483648
    %v1000 = vmul.f32 %v999, 1.442695
    %v1001 = vpow.pop %v1000
    %v1002 = vadd.f32 %v1001, 1.0
    %v1003 = vrcp.pop %v1002
    %v1004 = vmul.f32 1.0, %v1003
    %v1005 = vtanh.pop %v998
    %v1007 = vrot.slane %v912, 6
    %v1009 = vmul.f32 %v1004, %v1007
    %1011 = vrot.lane.b32.xlu0 %v1005, 64
    %v1012 = vpop.permute.xlu0 %1011
    %v1014 = vmul.f32 %v1004, %v1012
    %1016 = vrot.lane.b32.xlu0 %v1014, 32
    %v1017 = vpop.permute.xlu0 %1016
    %v1019 = vadd.f32 %v1009, %v1017
    %v1020 = vtanh.pop %v1019
    %1022 = vrot.lane.b32.xlu0 %v1020, 64
    %v1023 = vpop.permute.xlu0 %1022
    %v1025 = vmul.f32 %v1004, %v1023
    %vm1026 = vcmask 1041408
    %v1027 = vsel %vm1026, %v281, %v387
    %vm1028 = vcmask 1043456
    %v1029 = vsel %vm1028, %v1027, %v494
    %vm1030 = vcmask 1045504
    %v1031 = vsel %vm1030, %v1029, %v601
    %v1032 = vsel %vm1026, %v705, %v811
    %v1033 = vsel %vm1028, %v1032, %v918
    %v1034 = vsel %vm1030, %v1033, %v1025
    %v1035 = vld [vmem:[%s4] sm:$0xff]
    %v1036 = vld [vmem:[%s4 + $0x8] sm:$0xff]
    %v1037 = vld [vmem:[%s4 + $0x10] sm:$0xff]
    %v1038 = vld [vmem:[%s4 + $0x18] sm:$0xff]
    %v1039 = vld [vmem:[#allocation5] sm:$0xff]
    %v1040 = vld [vmem:[#allocation5 + $0x8] sm:$0xff]
    %v1041 = vld [vmem:[#allocation5 + $0x10] sm:$0xff]
    %v1042 = vld [vmem:[#allocation5 + $0x18] sm:$0xff]
    %v1043 = vld [vmem:[%s6] sm:$0x1]
    %v1045 = vlaneseq
    %v1046 = vshrl.u32 %v1045, 7
    %v1047 = vsub.s32 0, %v1046
    %v1048 = vrot.slane %v1043, %v1047
    %1052 = vrot.lane.b32.xlu0 %v1031, 32
    %v1053 = vpop.permute.xlu0 %1052
    %1054 = vrot.lane.b32.xlu0 %v1034, 32
    %v1055 = vpop.permute.xlu0 %1054
    %v1056 = vsel %vm183, %v1053, 0
    %v1058 = vsel %vm183, %v1055, 0
    %1060 = vmatprep.subr.mxu0 0.0
    %1061 = vmatpush1.msra.mxu0 %v1035
    %1062 = vmatprep.subr.mxu0 0.0
    %1063 = vmatpush1.msra.mxu0 %v1036
    %1064 = vmatprep.subr.mxu0 0.0
    %1065 = vmatpush1.msra.mxu0 %v1037
    %1066 = vmatprep.subr.mxu0 0.0
    %1067 = vmatpush1.msra.mxu0 %v1038
    %1068 = vmatprep.subr.mxu0 0.0
    %1069 = vmatpush1.msra.mxu0 0.0
    %1070 = vmatprep.subr.mxu0 0.0
    %1071 = vmatpush1.msra.mxu0 0.0
    %1072 = vmatprep.subr.mxu0 0.0
    %1073 = vmatpush1.msra.mxu0 0.0
    %1074 = vmatprep.subr.mxu0 0.0
    %1075 = vmatpush1.msra.mxu0 0.0
    %1076 = vmatprep.subr.mxu0 0.0
    %1077 = vmatpush1.msra.mxu0 0.0
    %1078 = vmatprep.subr.mxu0 0.0
    %1079 = vmatpush1.msra.mxu0 0.0
    %1080 = vmatprep.subr.mxu0 0.0
    %1081 = vmatpush1.msra.mxu0 0.0
    %1082 = vmatprep.subr.mxu0 0.0
    %1083 = vmatpush1.msra.mxu0 0.0
    %1084 = vmatprep.subr.mxu0 0.0
    %1085 = vmatpush1.msra.mxu0 0.0
    %1086 = vmatprep.subr.mxu0 0.0
    %1087 = vmatpush1.msra.mxu0 0.0
    %1088 = vmatprep.subr.mxu0 0.0
    %1089 = vmatpush1.msra.mxu0 0.0
    %1090 = vmatprep.subr.mxu0 0.0
    %1091 = vmatpush1.msra.mxu0 0.0
    %1092 = vmatprep.subr.mxu0 0.0
    %1093 = vmatpush1.msra.mxu0 0.0
    %1094 = vmatprep.subr.mxu0 0.0
    %1095 = vmatpush1.msra.mxu0 0.0
    %1096 = vmatprep.subr.mxu0 0.0
    %1097 = vmatpush1.msra.mxu0 0.0
    %1098 = vmatprep.subr.mxu0 0.0
    %1099 = vmatpush1.msra.mxu0 0.0
    %1100 = vmatprep.subr.mxu0 0.0
    %1101 = vmatpush1.msra.mxu0 0.0
    %1102 = vmatprep.subr.mxu0 0.0
    %1103 = vmatpush1.msra.mxu0 0.0
    %1104 = vmatprep.subr.mxu0 0.0
    %1105 = vmatpush1.msra.mxu0 0.0
    %1106 = vmatprep.subr.mxu0 0.0
    %1107 = vmatpush1.msra.mxu0 0.0
    %1108 = vmatprep.subr.mxu0 0.0
    %1109 = vmatpush1.msra.mxu0 0.0
    %1110 = vmatprep.subr.mxu0 0.0
    %1111 = vmatpush1.msra.mxu0 0.0
    %1112 = vmatprep.subr.mxu0 0.0
    %1113 = vmatpush1.msra.mxu0 0.0
    %1114 = vmatprep.subr.mxu0 0.0
    %1115 = vmatpush1.msra.mxu0 0.0
    %1116 = vmatprep.subr.mxu0 0.0
    %1117 = vmatpush1.msra.mxu0 0.0
    %1118 = vmatprep.subr.mxu0 0.0
    %1119 = vmatpush1.msra.mxu0 0.0
    %1120 = vmatprep.subr.mxu0 0.0
    %1121 = vmatpush1.msra.mxu0 0.0
    %1122 = vmatprep.subr.mxu0 0.0
    %1123 = vmatpush1.msra.mxu0 0.0
    %1124 = vmatprep.mubr.f32.mxu0 0.0
    %1125 = vmatmul.mubr.f32.gmra.mrb[0].mxu0 %v1056
    %v1126 = vpop.f32.mrb[0].mxu0
    %v1127 = vadd.f32 %v1048, %v1126
    %v1128 = vpop.f32.mrb[0].mxu0
    %1129 = vmatprep.mubr.f32.mxu0 0.0
    %1130 = vmatmul.mubr.f32.gmra.mrb[0].mxu0 %v1058
    %v1131 = vpop.f32.mrb[0].mxu0
    %v1132 = vadd.f32 %v1048, %v1131
    %v1133 = vpop.f32.mrb[0].mxu0
    %1134 = vdwg.mxu0
    %1135 = vmatprep.subr.mxu0 0.0
    %1136 = vmatpush1.msra.mxu0 %v1039
    %1137 = vmatprep.subr.mxu0 0.0
    %1138 = vmatpush1.msra.mxu0 %v1040
    %1139 = vmatprep.subr.mxu0 0.0
    %1140 = vmatpush1.msra.mxu0 %v1041
    %1141 = vmatprep.subr.mxu0 0.0
    %1142 = vmatpush1.msra.mxu0 %v1042
    %1143 = vmatprep.subr.mxu0 0.0
    %1144 = vmatpush1.msra.mxu0 0.0
    %1145 = vmatprep.subr.mxu0 0.0
    %1146 = vmatpush1.msra.mxu0 0.0
    %1147 = vmatprep.subr.mxu0 0.0
    %1148 = vmatpush1.msra.mxu0 0.0
    %1149 = vmatprep.subr.mxu0 0.0
    %1150 = vmatpush1.msra.mxu0 0.0
    %1151 = vmatprep.subr.mxu0 0.0
    %1152 = vmatpush1.msra.mxu0 0.0
    %1153 = vmatprep.subr.mxu0 0.0
    %1154 = vmatpush1.msra.mxu0 0.0
    %1155 = vmatprep.subr.mxu0 0.0
    %1156 = vmatpush1.msra.mxu0 0.0
    %1157 = vmatprep.subr.mxu0 0.0
    %1158 = vmatpush1.msra.mxu0 0.0
    %1159 = vmatprep.subr.mxu0 0.0
    %1160 = vmatpush1.msra.mxu0 0.0
    %1161 = vmatprep.subr.mxu0 0.0
    %1162 = vmatpush1.msra.mxu0 0.0
    %1163 = vmatprep.subr.mxu0 0.0
    %1164 = vmatpush1.msra.mxu0 0.0
    %1165 = vmatprep.subr.mxu0 0.0
    %1166 = vmatpush1.msra.mxu0 0.0
    %1167 = vmatprep.subr.mxu0 0.0
    %1168 = vmatpush1.msra.mxu0 0.0
    %1169 = vmatprep.subr.mxu0 0.0
    %1170 = vmatpush1.msra.mxu0 0.0
    %1171 = vmatprep.subr.mxu0 0.0
    %1172 = vmatpush1.msra.mxu0 0.0
    %1173 = vmatprep.subr.mxu0 0.0
    %1174 = vmatpush1.msra.mxu0 0.0
    %1175 = vmatprep.subr.mxu0 0.0
    %1176 = vmatpush1.msra.mxu0 0.0
    %1177 = vmatprep.subr.mxu0 0.0
    %1178 = vmatpush1.msra.mxu0 0.0
    %1179 = vmatprep.subr.mxu0 0.0
    %1180 = vmatpush1.msra.mxu0 0.0
    %1181 = vmatprep.subr.mxu0 0.0
    %1182 = vmatpush1.msra.mxu0 0.0
    %1183 = vmatprep.subr.mxu0 0.0
    %1184 = vmatpush1.msra.mxu0 0.0
    %1185 = vmatprep.subr.mxu0 0.0
    %1186 = vmatpush1.msra.mxu0 0.0
    %1187 = vmatprep.subr.mxu0 0.0
    %1188 = vmatpush1.msra.mxu0 0.0
    %1189 = vmatprep.subr.mxu0 0.0
    %1190 = vmatpush1.msra.mxu0 0.0
    %1191 = vmatprep.subr.mxu0 0.0
    %1192 = vmatpush1.msra.mxu0 0.0
    %1193 = vmatprep.subr.mxu0 0.0
    %1194 = vmatpush1.msra.mxu0 0.0
    %1195 = vmatprep.subr.mxu0 0.0
    %1196 = vmatpush1.msra.mxu0 0.0
    %1197 = vmatprep.subr.mxu0 0.0
    %1198 = vmatpush1.msra.mxu0 0.0
    %1199 = vmatprep.mubr.f32.mxu0 0.0
    %1200 = vmatmul.mubr.f32.gmra.mrb[0].mxu0 %v185
    %v1201 = vpop.f32.mrb[0].mxu0
    %v1202 = vadd.f32 0.0, %v1201
    %v1203 = vpop.f32.mrb[0].mxu0
    %1204 = vdwg.mxu0
    %v1205 = vadd.f32 %v1127, %v1202
    %v1206 = vxor.u32 %v1205, 2147483648
    %v1207 = vmul.f32 %v1206, 1.442695
    %v1208 = vpow.pop %v1207
    %v1209 = vadd.f32 %v1208, 1.0
    %v1210 = vrcp.pop %v1209
    %v1211 = vmul.f32 1.0, %v1210
    %v1212 = vtanh.pop %v1205
    %v1213 = vmul.f32 %v1211, 0.0
    %1215 = vrot.lane.b32.xlu0 %v1212, 64
    %v1216 = vpop.permute.xlu0 %1215
    %v1218 = vmul.f32 %v1211, %v1216
    %1220 = vrot.lane.b32.xlu0 %v1218, 32
    %v1221 = vpop.permute.xlu0 %1220
    %v1223 = vadd.f32 %v1213, %v1221
    %v1224 = vtanh.pop %v1223
    %1226 = vrot.lane.b32.xlu0 %v1224, 64
    %v1227 = vpop.permute.xlu0 %1226
    %v1229 = vmul.f32 %v1211, %v1227
    %1231 = vrot.lane.b32.xlu0 %v1229, 32
    %v1232 = vpop.permute.xlu0 %1231
    %v1233 = vsel %vm183, %v1232, 0
    %1235 = vmatprep.subr.mxu0 0.0
    %1236 = vmatpush1.msra.mxu0 %v1039
    %1237 = vmatprep.subr.mxu0 0.0
    %1238 = vmatpush1.msra.mxu0 %v1040
    %1239 = vmatprep.subr.mxu0 0.0
    %1240 = vmatpush1.msra.mxu0 %v1041
    %1241 = vmatprep.subr.mxu0 0.0
    %1242 = vmatpush1.msra.mxu0 %v1042
    %1243 = vmatprep.subr.mxu0 0.0
    %1244 = vmatpush1.msra.mxu0 0.0
    %1245 = vmatprep.subr.mxu0 0.0
    %1246 = vmatpush1.msra.mxu0 0.0
    %1247 = vmatprep.subr.mxu0 0.0
    %1248 = vmatpush1.msra.mxu0 0.0
    %1249 = vmatprep.subr.mxu0 0.0
    %1250 = vmatpush1.msra.mxu0 0.0
    %1251 = vmatprep.subr.mxu0 0.0
    %1252 = vmatpush1.msra.mxu0 0.0
    %1253 = vmatprep.subr.mxu0 0.0
    %1254 = vmatpush1.msra.mxu0 0.0
    %1255 = vmatprep.subr.mxu0 0.0
    %1256 = vmatpush1.msra.mxu0 0.0
    %1257 = vmatprep.subr.mxu0 0.0
    %1258 = vmatpush1.msra.mxu0 0.0
    %1259 = vmatprep.subr.mxu0 0.0
    %1260 = vmatpush1.msra.mxu0 0.0
    %1261 = vmatprep.subr.mxu0 0.0
    %1262 = vmatpush1.msra.mxu0 0.0
    %1263 = vmatprep.subr.mxu0 0.0
    %1264 = vmatpush1.msra.mxu0 0.0
    %1265 = vmatprep.subr.mxu0 0.0
    %1266 = vmatpush1.msra.mxu0 0.0
    %1267 = vmatprep.subr.mxu0 0.0
    %1268 = vmatpush1.msra.mxu0 0.0
    %1269 = vmatprep.subr.mxu0 0.0
    %1270 = vmatpush1.msra.mxu0 0.0
    %1271 = vmatprep.subr.mxu0 0.0
    %1272 = vmatpush1.msra.mxu0 0.0
    %1273 = vmatprep.subr.mxu0 0.0
    %1274 = vmatpush1.msra.mxu0 0.0
    %1275 = vmatprep.subr.mxu0 0.0
    %1276 = vmatpush1.msra.mxu0 0.0
    %1277 = vmatprep.subr.mxu0 0.0
    %1278 = vmatpush1.msra.mxu0 0.0
    %1279 = vmatprep.subr.mxu0 0.0
    %1280 = vmatpush1.msra.mxu0 0.0
    %1281 = vmatprep.subr.mxu0 0.0
    %1282 = vmatpush1.msra.mxu0 0.0
    %1283 = vmatprep.subr.mxu0 0.0
    %1284 = vmatpush1.msra.mxu0 0.0
    %1285 = vmatprep.subr.mxu0 0.0
    %1286 = vmatpush1.msra.mxu0 0.0
    %1287 = vmatprep.subr.mxu0 0.0
    %1288 = vmatpush1.msra.mxu0 0.0
    %1289 = vmatprep.subr.mxu0 0.0
    %1290 = vmatpush1.msra.mxu0 0.0
    %1291 = vmatprep.subr.mxu0 0.0
    %1292 = vmatpush1.msra.mxu0 0.0
    %1293 = vmatprep.subr.mxu0 0.0
    %1294 = vmatpush1.msra.mxu0 0.0
    %1295 = vmatprep.subr.mxu0 0.0
    %1296 = vmatpush1.msra.mxu0 0.0
    %1297 = vmatprep.subr.mxu0 0.0
    %1298 = vmatpush1.msra.mxu0 0.0
    %1299 = vmatprep.mubr.f32.mxu0 0.0
    %1300 = vmatmul.mubr.f32.gmra.mrb[0].mxu0 %v1233
    %v1301 = vpop.f32.mrb[0].mxu0
    %v1302 = vadd.f32 0.0, %v1301
    %v1303 = vpop.f32.mrb[0].mxu0
    %1304 = vdwg.mxu0
    %v1306 = vrot.slane %v1302, 6
    %v1308 = vadd.f32 %v1127, %v1306
    %v1309 = vxor.u32 %v1308, 2147483648
    %v1310 = vmul.f32 %v1309, 1.442695
    %v1311 = vpow.pop %v1310
    %v1312 = vadd.f32 %v1311, 1.0
    %v1313 = vrcp.pop %v1312
    %v1314 = vmul.f32 1.0, %v1313
    %v1315 = vtanh.pop %v1308
    %v1317 = vrot.slane %v1223, 6
    %v1319 = vmul.f32 %v1314, %v1317
    %1321 = vrot.lane.b32.xlu0 %v1315, 64
    %v1322 = vpop.permute.xlu0 %1321
    %v1324 = vmul.f32 %v1314, %v1322
    %1326 = vrot.lane.b32.xlu0 %v1324, 32
    %v1327 = vpop.permute.xlu0 %1326
    %v1329 = vadd.f32 %v1319, %v1327
    %v1330 = vtanh.pop %v1329
    %1332 = vrot.lane.b32.xlu0 %v1330, 64
    %v1333 = vpop.permute.xlu0 %1332
    %v1335 = vmul.f32 %v1314, %v1333
    %v1337 = vrot.slane %v1335, 2
    %1338 = vrot.lane.b32.xlu0 %v1337, 32
    %v1339 = vpop.permute.xlu0 %1338
    %v1340 = vsel %vm183, %v1339, 0
    %1342 = vmatprep.subr.mxu0 0.0
    %1343 = vmatpush1.msra.mxu0 %v1039
    %1344 = vmatprep.subr.mxu0 0.0
    %1345 = vmatpush1.msra.mxu0 %v1040
    %1346 = vmatprep.subr.mxu0 0.0
    %1347 = vmatpush1.msra.mxu0 %v1041
    %1348 = vmatprep.subr.mxu0 0.0
    %1349 = vmatpush1.msra.mxu0 %v1042
    %1350 = vmatprep.subr.mxu0 0.0
    %1351 = vmatpush1.msra.mxu0 0.0
    %1352 = vmatprep.subr.mxu0 0.0
    %1353 = vmatpush1.msra.mxu0 0.0
    %1354 = vmatprep.subr.mxu0 0.0
    %1355 = vmatpush1.msra.mxu0 0.0
    %1356 = vmatprep.subr.mxu0 0.0
    %1357 = vmatpush1.msra.mxu0 0.0
    %1358 = vmatprep.subr.mxu0 0.0
    %1359 = vmatpush1.msra.mxu0 0.0
    %1360 = vmatprep.subr.mxu0 0.0
    %1361 = vmatpush1.msra.mxu0 0.0
    %1362 = vmatprep.subr.mxu0 0.0
    %1363 = vmatpush1.msra.mxu0 0.0
    %1364 = vmatprep.subr.mxu0 0.0
    %1365 = vmatpush1.msra.mxu0 0.0
    %1366 = vmatprep.subr.mxu0 0.0
    %1367 = vmatpush1.msra.mxu0 0.0
    %1368 = vmatprep.subr.mxu0 0.0
    %1369 = vmatpush1.msra.mxu0 0.0
    %1370 = vmatprep.subr.mxu0 0.0
    %1371 = vmatpush1.msra.mxu0 0.0
    %1372 = vmatprep.subr.mxu0 0.0
    %1373 = vmatpush1.msra.mxu0 0.0
    %1374 = vmatprep.subr.mxu0 0.0
    %1375 = vmatpush1.msra.mxu0 0.0
    %1376 = vmatprep.subr.mxu0 0.0
    %1377 = vmatpush1.msra.mxu0 0.0
    %1378 = vmatprep.subr.mxu0 0.0
    %1379 = vmatpush1.msra.mxu0 0.0
    %1380 = vmatprep.subr.mxu0 0.0
    %1381 = vmatpush1.msra.mxu0 0.0
    %1382 = vmatprep.subr.mxu0 0.0
    %1383 = vmatpush1.msra.mxu0 0.0
    %1384 = vmatprep.subr.mxu0 0.0
    %1385 = vmatpush1.msra.mxu0 0.0
    %1386 = vmatprep.subr.mxu0 0.0
    %1387 = vmatpush1.msra.mxu0 0.0
    %1388 = vmatprep.subr.mxu0 0.0
    %1389 = vmatpush1.msra.mxu0 0.0
    %1390 = vmatprep.subr.mxu0 0.0
    %1391 = vmatpush1.msra.mxu0 0.0
    %1392 = vmatprep.subr.mxu0 0.0
    %1393 = vmatpush1.msra.mxu0 0.0
    %1394 = vmatprep.subr.mxu0 0.0
    %1395 = vmatpush1.msra.mxu0 0.0
    %1396 = vmatprep.subr.mxu0 0.0
    %1397 = vmatpush1.msra.mxu0 0.0
    %1398 = vmatprep.subr.mxu0 0.0
    %1399 = vmatpush1.msra.mxu0 0.0
    %1400 = vmatprep.subr.mxu0 0.0
    %1401 = vmatpush1.msra.mxu0 0.0
    %1402 = vmatprep.subr.mxu0 0.0
    %1403 = vmatpush1.msra.mxu0 0.0
    %1404 = vmatprep.subr.mxu0 0.0
    %1405 = vmatpush1.msra.mxu0 0.0
    %1406 = vmatprep.mubr.f32.mxu0 0.0
    %1407 = vmatmul.mubr.f32.gmra.mrb[0].mxu0 %v1340
    %v1408 = vpop.f32.mrb[0].mxu0
    %v1409 = vadd.f32 0.0, %v1408
    %v1410 = vpop.f32.mrb[0].mxu0
    %1411 = vdwg.mxu0
    %v1413 = vrot.slane %v1409, 4
    %v1415 = vadd.f32 %v1127, %v1413
    %v1416 = vxor.u32 %v1415, 2147483648
    %v1417 = vmul.f32 %v1416, 1.442695
    %v1418 = vpow.pop %v1417
    %v1419 = vadd.f32 %v1418, 1.0
    %v1420 = vrcp.pop %v1419
    %v1421 = vmul.f32 1.0, %v1420
    %v1422 = vtanh.pop %v1415
    %v1424 = vrot.slane %v1329, 6
    %v1426 = vmul.f32 %v1421, %v1424
    %1428 = vrot.lane.b32.xlu0 %v1422, 64
    %v1429 = vpop.permute.xlu0 %1428
    %v1431 = vmul.f32 %v1421, %v1429
    %1433 = vrot.lane.b32.xlu0 %v1431, 32
    %v1434 = vpop.permute.xlu0 %1433
    %v1436 = vadd.f32 %v1426, %v1434
    %v1437 = vtanh.pop %v1436
    %1439 = vrot.lane.b32.xlu0 %v1437, 64
    %v1440 = vpop.permute.xlu0 %1439
    %v1442 = vmul.f32 %v1421, %v1440
    %v1444 = vrot.slane %v1442, 4
    %1445 = vrot.lane.b32.xlu0 %v1444, 32
    %v1446 = vpop.permute.xlu0 %1445
    %v1447 = vsel %vm183, %v1446, 0
    %1449 = vmatprep.subr.mxu0 0.0
    %1450 = vmatpush1.msra.mxu0 %v1039
    %1451 = vmatprep.subr.mxu0 0.0
    %1452 = vmatpush1.msra.mxu0 %v1040
    %1453 = vmatprep.subr.mxu0 0.0
    %1454 = vmatpush1.msra.mxu0 %v1041
    %1455 = vmatprep.subr.mxu0 0.0
    %1456 = vmatpush1.msra.mxu0 %v1042
    %1457 = vmatprep.subr.mxu0 0.0
    %1458 = vmatpush1.msra.mxu0 0.0
    %1459 = vmatprep.subr.mxu0 0.0
    %1460 = vmatpush1.msra.mxu0 0.0
    %1461 = vmatprep.subr.mxu0 0.0
    %1462 = vmatpush1.msra.mxu0 0.0
    %1463 = vmatprep.subr.mxu0 0.0
    %1464 = vmatpush1.msra.mxu0 0.0
    %1465 = vmatprep.subr.mxu0 0.0
    %1466 = vmatpush1.msra.mxu0 0.0
    %1467 = vmatprep.subr.mxu0 0.0
    %1468 = vmatpush1.msra.mxu0 0.0
    %1469 = vmatprep.subr.mxu0 0.0
    %1470 = vmatpush1.msra.mxu0 0.0
    %1471 = vmatprep.subr.mxu0 0.0
    %1472 = vmatpush1.msra.mxu0 0.0
    %1473 = vmatprep.subr.mxu0 0.0
    %1474 = vmatpush1.msra.mxu0 0.0
    %1475 = vmatprep.subr.mxu0 0.0
    %1476 = vmatpush1.msra.mxu0 0.0
    %1477 = vmatprep.subr.mxu0 0.0
    %1478 = vmatpush1.msra.mxu0 0.0
    %1479 = vmatprep.subr.mxu0 0.0
    %1480 = vmatpush1.msra.mxu0 0.0
    %1481 = vmatprep.subr.mxu0 0.0
    %1482 = vmatpush1.msra.mxu0 0.0
    %1483 = vmatprep.subr.mxu0 0.0
    %1484 = vmatpush1.msra.mxu0 0.0
    %1485 = vmatprep.subr.mxu0 0.0
    %1486 = vmatpush1.msra.mxu0 0.0
    %1487 = vmatprep.subr.mxu0 0.0
    %1488 = vmatpush1.msra.mxu0 0.0
    %1489 = vmatprep.subr.mxu0 0.0
    %1490 = vmatpush1.msra.mxu0 0.0
    %1491 = vmatprep.subr.mxu0 0.0
    %1492 = vmatpush1.msra.mxu0 0.0
    %1493 = vmatprep.subr.mxu0 0.0
    %1494 = vmatpush1.msra.mxu0 0.0
    %1495 = vmatprep.subr.mxu0 0.0
    %1496 = vmatpush1.msra.mxu0 0.0
    %1497 = vmatprep.subr.mxu0 0.0
    %1498 = vmatpush1.msra.mxu0 0.0
    %1499 = vmatprep.subr.mxu0 0.0
    %1500 = vmatpush1.msra.mxu0 0.0
    %1501 = vmatprep.subr.mxu0 0.0
    %1502 = vmatpush1.msra.mxu0 0.0
    %1503 = vmatprep.subr.mxu0 0.0
    %1504 = vmatpush1.msra.mxu0 0.0
    %1505 = vmatprep.subr.mxu0 0.0
    %1506 = vmatpush1.msra.mxu0 0.0
    %1507 = vmatprep.subr.mxu0 0.0
    %1508 = vmatpush1.msra.mxu0 0.0
    %1509 = vmatprep.subr.mxu0 0.0
    %1510 = vmatpush1.msra.mxu0 0.0
    %1511 = vmatprep.subr.mxu0 0.0
    %1512 = vmatpush1.msra.mxu0 0.0
    %1513 = vmatprep.mubr.f32.mxu0 0.0
    %1514 = vmatmul.mubr.f32.gmra.mrb[0].mxu0 %v1447
    %v1515 = vpop.f32.mrb[0].mxu0
    %v1516 = vadd.f32 0.0, %v1515
    %v1517 = vpop.f32.mrb[0].mxu0
    %1518 = vdwg.mxu0
    %v1520 = vrot.slane %v1516, 2
    %v1522 = vadd.f32 %v1127, %v1520
    %v1523 = vxor.u32 %v1522, 2147483648
    %v1524 = vmul.f32 %v1523, 1.442695
    %v1525 = vpow.pop %v1524
    %v1526 = vadd.f32 %v1525, 1.0
    %v1527 = vrcp.pop %v1526
    %v1528 = vmul.f32 1.0, %v1527
    %v1529 = vtanh.pop %v1522
    %v1531 = vrot.slane %v1436, 6
    %v1533 = vmul.f32 %v1528, %v1531
    %1535 = vrot.lane.b32.xlu0 %v1529, 64
    %v1536 = vpop.permute.xlu0 %1535
    %v1538 = vmul.f32 %v1528, %v1536
    %1540 = vrot.lane.b32.xlu0 %v1538, 32
    %v1541 = vpop.permute.xlu0 %1540
    %v1543 = vadd.f32 %v1533, %v1541
    %v1544 = vtanh.pop %v1543
    %1546 = vrot.lane.b32.xlu0 %v1544, 64
    %v1547 = vpop.permute.xlu0 %1546
    %v1549 = vmul.f32 %v1528, %v1547
    %v1551 = vrot.slane %v1549, 6
    %1552 = vrot.lane.b32.xlu0 %v1551, 32
    %v1553 = vpop.permute.xlu0 %1552
    %v1554 = vsel %vm183, %v1553, 0
    %1556 = vmatprep.subr.mxu0 0.0
    %1557 = vmatpush1.msra.mxu0 %v1039
    %1558 = vmatprep.subr.mxu0 0.0
    %1559 = vmatpush1.msra.mxu0 %v1040
    %1560 = vmatprep.subr.mxu0 0.0
    %1561 = vmatpush1.msra.mxu0 %v1041
    %1562 = vmatprep.subr.mxu0 0.0
    %1563 = vmatpush1.msra.mxu0 %v1042
    %1564 = vmatprep.subr.mxu0 0.0
    %1565 = vmatpush1.msra.mxu0 0.0
    %1566 = vmatprep.subr.mxu0 0.0
    %1567 = vmatpush1.msra.mxu0 0.0
    %1568 = vmatprep.subr.mxu0 0.0
    %1569 = vmatpush1.msra.mxu0 0.0
    %1570 = vmatprep.subr.mxu0 0.0
    %1571 = vmatpush1.msra.mxu0 0.0
    %1572 = vmatprep.subr.mxu0 0.0
    %1573 = vmatpush1.msra.mxu0 0.0
    %1574 = vmatprep.subr.mxu0 0.0
    %1575 = vmatpush1.msra.mxu0 0.0
    %1576 = vmatprep.subr.mxu0 0.0
    %1577 = vmatpush1.msra.mxu0 0.0
    %1578 = vmatprep.subr.mxu0 0.0
    %1579 = vmatpush1.msra.mxu0 0.0
    %1580 = vmatprep.subr.mxu0 0.0
    %1581 = vmatpush1.msra.mxu0 0.0
    %1582 = vmatprep.subr.mxu0 0.0
    %1583 = vmatpush1.msra.mxu0 0.0
    %1584 = vmatprep.subr.mxu0 0.0
    %1585 = vmatpush1.msra.mxu0 0.0
    %1586 = vmatprep.subr.mxu0 0.0
    %1587 = vmatpush1.msra.mxu0 0.0
    %1588 = vmatprep.subr.mxu0 0.0
    %1589 = vmatpush1.msra.mxu0 0.0
    %1590 = vmatprep.subr.mxu0 0.0
    %1591 = vmatpush1.msra.mxu0 0.0
    %1592 = vmatprep.subr.mxu0 0.0
    %1593 = vmatpush1.msra.mxu0 0.0
    %1594 = vmatprep.subr.mxu0 0.0
    %1595 = vmatpush1.msra.mxu0 0.0
    %1596 = vmatprep.subr.mxu0 0.0
    %1597 = vmatpush1.msra.mxu0 0.0
    %1598 = vmatprep.subr.mxu0 0.0
    %1599 = vmatpush1.msra.mxu0 0.0
    %1600 = vmatprep.subr.mxu0 0.0
    %1601 = vmatpush1.msra.mxu0 0.0
    %1602 = vmatprep.subr.mxu0 0.0
    %1603 = vmatpush1.msra.mxu0 0.0
    %1604 = vmatprep.subr.mxu0 0.0
    %1605 = vmatpush1.msra.mxu0 0.0
    %1606 = vmatprep.subr.mxu0 0.0
    %1607 = vmatpush1.msra.mxu0 0.0
    %1608 = vmatprep.subr.mxu0 0.0
    %1609 = vmatpush1.msra.mxu0 0.0
    %1610 = vmatprep.subr.mxu0 0.0
    %1611 = vmatpush1.msra.mxu0 0.0
    %1612 = vmatprep.subr.mxu0 0.0
    %1613 = vmatpush1.msra.mxu0 0.0
    %1614 = vmatprep.subr.mxu0 0.0
    %1615 = vmatpush1.msra.mxu0 0.0
    %1616 = vmatprep.subr.mxu0 0.0
    %1617 = vmatpush1.msra.mxu0 0.0
    %1618 = vmatprep.subr.mxu0 0.0
    %1619 = vmatpush1.msra.mxu0 0.0
    %1620 = vmatprep.mubr.f32.mxu0 0.0
    %1621 = vmatmul.mubr.f32.gmra.mrb[0].mxu0 %v1554
    %v1622 = vpop.f32.mrb[0].mxu0
    %v1623 = vadd.f32 0.0, %v1622
    %v1624 = vpop.f32.mrb[0].mxu0
    %1625 = vdwg.mxu0
    %v1626 = vadd.f32 %v1132, %v1623
    %v1627 = vxor.u32 %v1626, 2147483648
    %v1628 = vmul.f32 %v1627, 1.442695
    %v1629 = vpow.pop %v1628
    %v1630 = vadd.f32 %v1629, 1.0
    %v1631 = vrcp.pop %v1630
    %v1632 = vmul.f32 1.0, %v1631
    %v1633 = vtanh.pop %v1626
    %v1635 = vrot.slane %v1543, 6
    %v1637 = vmul.f32 %v1632, %v1635
    %1639 = vrot.lane.b32.xlu0 %v1633, 64
    %v1640 = vpop.permute.xlu0 %1639
    %v1642 = vmul.f32 %v1632, %v1640
    %1644 = vrot.lane.b32.xlu0 %v1642, 32
    %v1645 = vpop.permute.xlu0 %1644
    %v1647 = vadd.f32 %v1637, %v1645
    %v1648 = vtanh.pop %v1647
    %1650 = vrot.lane.b32.xlu0 %v1648, 64
    %v1651 = vpop.permute.xlu0 %1650
    %v1653 = vmul.f32 %v1632, %v1651
    %1655 = vrot.lane.b32.xlu0 %v1653, 32
    %v1656 = vpop.permute.xlu0 %1655
    %v1657 = vsel %vm183, %v1656, 0
    %1659 = vmatprep.subr.mxu0 0.0
    %1660 = vmatpush1.msra.mxu0 %v1039
    %1661 = vmatprep.subr.mxu0 0.0
    %1662 = vmatpush1.msra.mxu0 %v1040
    %1663 = vmatprep.subr.mxu0 0.0
    %1664 = vmatpush1.msra.mxu0 %v1041
    %1665 = vmatprep.subr.mxu0 0.0
    %1666 = vmatpush1.msra.mxu0 %v1042
    %1667 = vmatprep.subr.mxu0 0.0
    %1668 = vmatpush1.msra.mxu0 0.0
    %1669 = vmatprep.subr.mxu0 0.0
    %1670 = vmatpush1.msra.mxu0 0.0
    %1671 = vmatprep.subr.mxu0 0.0
    %1672 = vmatpush1.msra.mxu0 0.0
    %1673 = vmatprep.subr.mxu0 0.0
    %1674 = vmatpush1.msra.mxu0 0.0
    %1675 = vmatprep.subr.mxu0 0.0
    %1676 = vmatpush1.msra.mxu0 0.0
    %1677 = vmatprep.subr.mxu0 0.0
    %1678 = vmatpush1.msra.mxu0 0.0
    %1679 = vmatprep.subr.mxu0 0.0
    %1680 = vmatpush1.msra.mxu0 0.0
    %1681 = vmatprep.subr.mxu0 0.0
    %1682 = vmatpush1.msra.mxu0 0.0
    %1683 = vmatprep.subr.mxu0 0.0
    %1684 = vmatpush1.msra.mxu0 0.0
    %1685 = vmatprep.subr.mxu0 0.0
    %1686 = vmatpush1.msra.mxu0 0.0
    %1687 = vmatprep.subr.mxu0 0.0
    %1688 = vmatpush1.msra.mxu0 0.0
    %1689 = vmatprep.subr.mxu0 0.0
    %1690 = vmatpush1.msra.mxu0 0.0
    %1691 = vmatprep.subr.mxu0 0.0
    %1692 = vmatpush1.msra.mxu0 0.0
    %1693 = vmatprep.subr.mxu0 0.0
    %1694 = vmatpush1.msra.mxu0 0.0
    %1695 = vmatprep.subr.mxu0 0.0
    %1696 = vmatpush1.msra.mxu0 0.0
    %1697 = vmatprep.subr.mxu0 0.0
    %1698 = vmatpush1.msra.mxu0 0.0
    %1699 = vmatprep.subr.mxu0 0.0
    %1700 = vmatpush1.msra.mxu0 0.0
    %1701 = vmatprep.subr.mxu0 0.0
    %1702 = vmatpush1.msra.mxu0 0.0
    %1703 = vmatprep.subr.mxu0 0.0
    %1704 = vmatpush1.msra.mxu0 0.0
    %1705 = vmatprep.subr.mxu0 0.0
    %1706 = vmatpush1.msra.mxu0 0.0
    %1707 = vmatprep.subr.mxu0 0.0
    %1708 = vmatpush1.msra.mxu0 0.0
    %1709 = vmatprep.subr.mxu0 0.0
    %1710 = vmatpush1.msra.mxu0 0.0
    %1711 = vmatprep.subr.mxu0 0.0
    %1712 = vmatpush1.msra.mxu0 0.0
    %1713 = vmatprep.subr.mxu0 0.0
    %1714 = vmatpush1.msra.mxu0 0.0
    %1715 = vmatprep.subr.mxu0 0.0
    %1716 = vmatpush1.msra.mxu0 0.0
    %1717 = vmatprep.subr.mxu0 0.0
    %1718 = vmatpush1.msra.mxu0 0.0
    %1719 = vmatprep.subr.mxu0 0.0
    %1720 = vmatpush1.msra.mxu0 0.0
    %1721 = vmatprep.subr.mxu0 0.0
    %1722 = vmatpush1.msra.mxu0 0.0
    %1723 = vmatprep.mubr.f32.mxu0 0.0
    %1724 = vmatmul.mubr.f32.gmra.mrb[0].mxu0 %v1657
    %v1725 = vpop.f32.mrb[0].mxu0
    %v1726 = vadd.f32 0.0, %v1725
    %v1727 = vpop.f32.mrb[0].mxu0
    %1728 = vdwg.mxu0
    %v1730 = vrot.slane %v1726, 6
    %v1732 = vadd.f32 %v1132, %v1730
    %v1733 = vxor.u32 %v1732, 2147483648
    %v1734 = vmul.f32 %v1733, 1.442695
    %v1735 = vpow.pop %v1734
    %v1736 = vadd.f32 %v1735, 1.0
    %v1737 = vrcp.pop %v1736
    %v1738 = vmul.f32 1.0, %v1737
    %v1739 = vtanh.pop %v1732
    %v1741 = vrot.slane %v1647, 6
    %v1743 = vmul.f32 %v1738, %v1741
    %1745 = vrot.lane.b32.xlu0 %v1739, 64
    %v1746 = vpop.permute.xlu0 %1745
    %v1748 = vmul.f32 %v1738, %v1746
    %1750 = vrot.lane.b32.xlu0 %v1748, 32
    %v1751 = vpop.permute.xlu0 %1750
    %v1753 = vadd.f32 %v1743, %v1751
    %v1754 = vtanh.pop %v1753
    %1756 = vrot.lane.b32.xlu0 %v1754, 64
    %v1757 = vpop.permute.xlu0 %1756
    %v1759 = vmul.f32 %v1738, %v1757
    %v1761 = vrot.slane %v1759, 2
    %1762 = vrot.lane.b32.xlu0 %v1761, 32
    %v1763 = vpop.permute.xlu0 %1762
    %v1764 = vsel %vm183, %v1763, 0
    %1766 = vmatprep.subr.mxu0 0.0
    %1767 = vmatpush1.msra.mxu0 %v1039
    %1768 = vmatprep.subr.mxu0 0.0
    %1769 = vmatpush1.msra.mxu0 %v1040
    %1770 = vmatprep.subr.mxu0 0.0
    %1771 = vmatpush1.msra.mxu0 %v1041
    %1772 = vmatprep.subr.mxu0 0.0
    %1773 = vmatpush1.msra.mxu0 %v1042
    %1774 = vmatprep.subr.mxu0 0.0
    %1775 = vmatpush1.msra.mxu0 0.0
    %1776 = vmatprep.subr.mxu0 0.0
    %1777 = vmatpush1.msra.mxu0 0.0
    %1778 = vmatprep.subr.mxu0 0.0
    %1779 = vmatpush1.msra.mxu0 0.0
    %1780 = vmatprep.subr.mxu0 0.0
    %1781 = vmatpush1.msra.mxu0 0.0
    %1782 = vmatprep.subr.mxu0 0.0
    %1783 = vmatpush1.msra.mxu0 0.0
    %1784 = vmatprep.subr.mxu0 0.0
    %1785 = vmatpush1.msra.mxu0 0.0
    %1786 = vmatprep.subr.mxu0 0.0
    %1787 = vmatpush1.msra.mxu0 0.0
    %1788 = vmatprep.subr.mxu0 0.0
    %1789 = vmatpush1.msra.mxu0 0.0
    %1790 = vmatprep.subr.mxu0 0.0
    %1791 = vmatpush1.msra.mxu0 0.0
    %1792 = vmatprep.subr.mxu0 0.0
    %1793 = vmatpush1.msra.mxu0 0.0
    %1794 = vmatprep.subr.mxu0 0.0
    %1795 = vmatpush1.msra.mxu0 0.0
    %1796 = vmatprep.subr.mxu0 0.0
    %1797 = vmatpush1.msra.mxu0 0.0
    %1798 = vmatprep.subr.mxu0 0.0
    %1799 = vmatpush1.msra.mxu0 0.0
    %1800 = vmatprep.subr.mxu0 0.0
    %1801 = vmatpush1.msra.mxu0 0.0
    %1802 = vmatprep.subr.mxu0 0.0
    %1803 = vmatpush1.msra.mxu0 0.0
    %1804 = vmatprep.subr.mxu0 0.0
    %1805 = vmatpush1.msra.mxu0 0.0
    %1806 = vmatprep.subr.mxu0 0.0
    %1807 = vmatpush1.msra.mxu0 0.0
    %1808 = vmatprep.subr.mxu0 0.0
    %1809 = vmatpush1.msra.mxu0 0.0
    %1810 = vmatprep.subr.mxu0 0.0
    %1811 = vmatpush1.msra.mxu0 0.0
    %1812 = vmatprep.subr.mxu0 0.0
    %1813 = vmatpush1.msra.mxu0 0.0
    %1814 = vmatprep.subr.mxu0 0.0
    %1815 = vmatpush1.msra.mxu0 0.0
    %1816 = vmatprep.subr.mxu0 0.0
    %1817 = vmatpush1.msra.mxu0 0.0
    %1818 = vmatprep.subr.mxu0 0.0
    %1819 = vmatpush1.msra.mxu0 0.0
    %1820 = vmatprep.subr.mxu0 0.0
    %1821 = vmatpush1.msra.mxu0 0.0
    %1822 = vmatprep.subr.mxu0 0.0
    %1823 = vmatpush1.msra.mxu0 0.0
    %1824 = vmatprep.subr.mxu0 0.0
    %1825 = vmatpush1.msra.mxu0 0.0
    %1826 = vmatprep.subr.mxu0 0.0
    %1827 = vmatpush1.msra.mxu0 0.0
    %1828 = vmatprep.subr.mxu0 0.0
    %1829 = vmatpush1.msra.mxu0 0.0
    %1830 = vmatprep.mubr.f32.mxu0 0.0
    %1831 = vmatmul.mubr.f32.gmra.mrb[0].mxu0 %v1764
    %v1832 = vpop.f32.mrb[0].mxu0
    %v1833 = vadd.f32 0.0, %v1832
    %v1834 = vpop.f32.mrb[0].mxu0
    %1835 = vdwg.mxu0
    %v1837 = vrot.slane %v1833, 4
    %v1839 = vadd.f32 %v1132, %v1837
    %v1840 = vxor.u32 %v1839, 2147483648
    %v1841 = vmul.f32 %v1840, 1.442695
    %v1842 = vpow.pop %v1841
    %v1843 = vadd.f32 %v1842, 1.0
    %v1844 = vrcp.pop %v1843
    %v1845 = vmul.f32 1.0, %v1844
    %v1846 = vtanh.pop %v1839
    %v1848 = vrot.slane %v1753, 6
    %v1850 = vmul.f32 %v1845, %v1848
    %1852 = vrot.lane.b32.xlu0 %v1846, 64
    %v1853 = vpop.permute.xlu0 %1852
    %v1855 = vmul.f32 %v1845, %v1853
    %1857 = vrot.lane.b32.xlu0 %v1855, 32
    %v1858 = vpop.permute.xlu0 %1857
    %v1860 = vadd.f32 %v1850, %v1858
    %v1861 = vtanh.pop %v1860
    %1863 = vrot.lane.b32.xlu0 %v1861, 64
    %v1864 = vpop.permute.xlu0 %1863
    %v1866 = vmul.f32 %v1845, %v1864
    %v1868 = vrot.slane %v1866, 4
    %1869 = vrot.lane.b32.xlu0 %v1868, 32
    %v1870 = vpop.permute.xlu0 %1869
    %v1871 = vsel %vm183, %v1870, 0
    %1873 = vmatprep.subr.mxu0 0.0
    %1874 = vmatpush1.msra.mxu0 %v1039
    %1875 = vmatprep.subr.mxu0 0.0
    %1876 = vmatpush1.msra.mxu0 %v1040
    %1877 = vmatprep.subr.mxu0 0.0
    %1878 = vmatpush1.msra.mxu0 %v1041
    %1879 = vmatprep.subr.mxu0 0.0
    %1880 = vmatpush1.msra.mxu0 %v1042
    %1881 = vmatprep.subr.mxu0 0.0
    %1882 = vmatpush1.msra.mxu0 0.0
    %1883 = vmatprep.subr.mxu0 0.0
    %1884 = vmatpush1.msra.mxu0 0.0
    %1885 = vmatprep.subr.mxu0 0.0
    %1886 = vmatpush1.msra.mxu0 0.0
    %1887 = vmatprep.subr.mxu0 0.0
    %1888 = vmatpush1.msra.mxu0 0.0
    %1889 = vmatprep.subr.mxu0 0.0
    %1890 = vmatpush1.msra.mxu0 0.0
    %1891 = vmatprep.subr.mxu0 0.0
    %1892 = vmatpush1.msra.mxu0 0.0
    %1893 = vmatprep.subr.mxu0 0.0
    %1894 = vmatpush1.msra.mxu0 0.0
    %1895 = vmatprep.subr.mxu0 0.0
    %1896 = vmatpush1.msra.mxu0 0.0
    %1897 = vmatprep.subr.mxu0 0.0
    %1898 = vmatpush1.msra.mxu0 0.0
    %1899 = vmatprep.subr.mxu0 0.0
    %1900 = vmatpush1.msra.mxu0 0.0
    %1901 = vmatprep.subr.mxu0 0.0
    %1902 = vmatpush1.msra.mxu0 0.0
    %1903 = vmatprep.subr.mxu0 0.0
    %1904 = vmatpush1.msra.mxu0 0.0
    %1905 = vmatprep.subr.mxu0 0.0
    %1906 = vmatpush1.msra.mxu0 0.0
    %1907 = vmatprep.subr.mxu0 0.0
    %1908 = vmatpush1.msra.mxu0 0.0
    %1909 = vmatprep.subr.mxu0 0.0
    %1910 = vmatpush1.msra.mxu0 0.0
    %1911 = vmatprep.subr.mxu0 0.0
    %1912 = vmatpush1.msra.mxu0 0.0
    %1913 = vmatprep.subr.mxu0 0.0
    %1914 = vmatpush1.msra.mxu0 0.0
    %1915 = vmatprep.subr.mxu0 0.0
    %1916 = vmatpush1.msra.mxu0 0.0
    %1917 = vmatprep.subr.mxu0 0.0
    %1918 = vmatpush1.msra.mxu0 0.0
    %1919 = vmatprep.subr.mxu0 0.0
    %1920 = vmatpush1.msra.mxu0 0.0
    %1921 = vmatprep.subr.mxu0 0.0
    %1922 = vmatpush1.msra.mxu0 0.0
    %1923 = vmatprep.subr.mxu0 0.0
    %1924 = vmatpush1.msra.mxu0 0.0
    %1925 = vmatprep.subr.mxu0 0.0
    %1926 = vmatpush1.msra.mxu0 0.0
    %1927 = vmatprep.subr.mxu0 0.0
    %1928 = vmatpush1.msra.mxu0 0.0
    %1929 = vmatprep.subr.mxu0 0.0
    %1930 = vmatpush1.msra.mxu0 0.0
    %1931 = vmatprep.subr.mxu0 0.0
    %1932 = vmatpush1.msra.mxu0 0.0
    %1933 = vmatprep.subr.mxu0 0.0
    %1934 = vmatpush1.msra.mxu0 0.0
    %1935 = vmatprep.subr.mxu0 0.0
    %1936 = vmatpush1.msra.mxu0 0.0
    %1937 = vmatprep.mubr.f32.mxu0 0.0
    %1938 = vmatmul.mubr.f32.gmra.mrb[0].mxu0 %v1871
    %v1939 = vpop.f32.mrb[0].mxu0
    %v1940 = vadd.f32 0.0, %v1939
    %v1941 = vpop.f32.mrb[0].mxu0
    %1942 = vdwg.mxu0
    %v1944 = vrot.slane %v1940, 2
    %v1946 = vadd.f32 %v1132, %v1944
    %v1947 = vxor.u32 %v1946, 2147483648
    %v1948 = vmul.f32 %v1947, 1.442695
    %v1949 = vpow.pop %v1948
    %v1950 = vadd.f32 %v1949, 1.0
    %v1951 = vrcp.pop %v1950
    %v1952 = vmul.f32 1.0, %v1951
    %v1953 = vtanh.pop %v1946
    %v1955 = vrot.slane %v1860, 6
    %v1957 = vmul.f32 %v1952, %v1955
    %1959 = vrot.lane.b32.xlu0 %v1953, 64
    %v1960 = vpop.permute.xlu0 %1959
    %v1962 = vmul.f32 %v1952, %v1960
    %1964 = vrot.lane.b32.xlu0 %v1962, 32
    %v1965 = vpop.permute.xlu0 %1964
    %v1967 = vadd.f32 %v1957, %v1965
    %v1968 = vtanh.pop %v1967
    %1970 = vrot.lane.b32.xlu0 %v1968, 64
    %v1971 = vpop.permute.xlu0 %1970
    %v1973 = vmul.f32 %v1952, %v1971
    %v1974 = vld [vmem:[#allocation7] sm:$0xff]
    %v1975 = vld [vmem:[#allocation7 + $0x8] sm:$0xff]
    %v1976 = vld [vmem:[#allocation7 + $0x10] sm:$0xff]
    %v1977 = vld [vmem:[#allocation7 + $0x18] sm:$0xff]
    %v1978 = vld [vmem:[#allocation8] sm:$0x1]
    %v1980 = vlaneseq
    %v1981 = vshrl.u32 %v1980, 7
    %v1982 = vsub.s32 0, %v1981
    %v1983 = vrot.slane %v1978, %v1982
    %v1986 = vrot.slane %v1973, 6
    %1987 = vrot.lane.b32.xlu0 %v1986, 32
    %v1988 = vpop.permute.xlu0 %1987
    %v1989 = vsel %vm183, %v1988, 0
    %1991 = vmatprep.subr.mxu0 0.0
    %1992 = vmatpush1.msra.mxu0 %v1974
    %1993 = vmatprep.subr.mxu0 0.0
    %1994 = vmatpush1.msra.mxu0 %v1975
    %1995 = vmatprep.subr.mxu0 0.0
    %1996 = vmatpush1.msra.mxu0 %v1976
    %1997 = vmatprep.subr.mxu0 0.0
    %1998 = vmatpush1.msra.mxu0 %v1977
    %1999 = vmatprep.subr.mxu0 0.0
    %2000 = vmatpush1.msra.mxu0 0.0
    %2001 = vmatprep.subr.mxu0 0.0
    %2002 = vmatpush1.msra.mxu0 0.0
    %2003 = vmatprep.subr.mxu0 0.0
    %2004 = vmatpush1.msra.mxu0 0.0
    %2005 = vmatprep.subr.mxu0 0.0
    %2006 = vmatpush1.msra.mxu0 0.0
    %2007 = vmatprep.subr.mxu0 0.0
    %2008 = vmatpush1.msra.mxu0 0.0
    %2009 = vmatprep.subr.mxu0 0.0
    %2010 = vmatpush1.msra.mxu0 0.0
    %2011 = vmatprep.subr.mxu0 0.0
    %2012 = vmatpush1.msra.mxu0 0.0
    %2013 = vmatprep.subr.mxu0 0.0
    %2014 = vmatpush1.msra.mxu0 0.0
    %2015 = vmatprep.subr.mxu0 0.0
    %2016 = vmatpush1.msra.mxu0 0.0
    %2017 = vmatprep.subr.mxu0 0.0
    %2018 = vmatpush1.msra.mxu0 0.0
    %2019 = vmatprep.subr.mxu0 0.0
    %2020 = vmatpush1.msra.mxu0 0.0
    %2021 = vmatprep.subr.mxu0 0.0
    %2022 = vmatpush1.msra.mxu0 0.0
    %2023 = vmatprep.subr.mxu0 0.0
    %2024 = vmatpush1.msra.mxu0 0.0
    %2025 = vmatprep.subr.mxu0 0.0
    %2026 = vmatpush1.msra.mxu0 0.0
    %2027 = vmatprep.subr.mxu0 0.0
    %2028 = vmatpush1.msra.mxu0 0.0
    %2029 = vmatprep.subr.mxu0 0.0
    %2030 = vmatpush1.msra.mxu0 0.0
    %2031 = vmatprep.subr.mxu0 0.0
    %2032 = vmatpush1.msra.mxu0 0.0
    %2033 = vmatprep.subr.mxu0 0.0
    %2034 = vmatpush1.msra.mxu0 0.0
    %2035 = vmatprep.subr.mxu0 0.0
    %2036 = vmatpush1.msra.mxu0 0.0
    %2037 = vmatprep.subr.mxu0 0.0
    %2038 = vmatpush1.msra.mxu0 0.0
    %2039 = vmatprep.subr.mxu0 0.0
    %2040 = vmatpush1.msra.mxu0 0.0
    %2041 = vmatprep.subr.mxu0 0.0
    %2042 = vmatpush1.msra.mxu0 0.0
    %2043 = vmatprep.subr.mxu0 0.0
    %2044 = vmatpush1.msra.mxu0 0.0
    %2045 = vmatprep.subr.mxu0 0.0
    %2046 = vmatpush1.msra.mxu0 0.0
    %2047 = vmatprep.subr.mxu0 0.0
    %2048 = vmatpush1.msra.mxu0 0.0
    %2049 = vmatprep.subr.mxu0 0.0
    %2050 = vmatpush1.msra.mxu0 0.0
    %2051 = vmatprep.subr.mxu0 0.0
    %2052 = vmatpush1.msra.mxu0 0.0
    %2053 = vmatprep.subr.mxu0 0.0
    %2054 = vmatpush1.msra.mxu0 0.0
    %2055 = vmatprep.mubr.f32.mxu0 0.0
    %2056 = vmatmul.mubr.f32.gmra.mrb[0].mxu0 %v1989
    %v2057 = vpop.f32.mrb[0].mxu0
    %v2058 = vadd.f32 %v1983, %v2057
    %v2059 = vpop.f32.mrb[0].mxu0
    %2060 = vdwg.mxu0
    %vm2061 = vcmask 254976
    %2062 = vst.msk [vmem:[#allocation10] sm:$0x3] %vm2061, %v2058
    // Predicated region
    $region54: #{lstm_forward.1} parent=1 // pred_check
      _
    $region55: #{lstm_forward.1} parent=1 // pred_check_branch
      %2064 = sbr.rel (0) target = $region57
    $region56: #{lstm_forward.1} parent=1 // pred_region
      %s2066 = ssub.s32 32, 32
      %2067 = vsyncadd [#allocation4], %s2066
      %s2069 = sshll.u32 [#allocation10], 4
      %s2070 = int_to_ptr.vmem [resolvable:$true] %s2069
      %2072 = dma.vmem_to_hbm [thread:$0]  %s2070, 32, %s9, [#allocation4]
    $region57: #{lstm_forward.1} parent=1 // pred_fallthru
      _
    // Predicated region
    $region58: #{lstm_forward.1} parent=1 // pred_check
      _
    $region59: #{lstm_forward.1} parent=1 // pred_check_branch
      %2074 = sbr.rel (0) target = $region61
    $region60: #{lstm_forward.1} parent=1 // pred_region
      %2075 = dma.done [#allocation4], 32
    $region61: #{lstm_forward.1} parent=1 // pred_fallthru
      _
    %2076 = vsyncpa [#allocation3], 1
    %2077 = vsyncpa [#allocation6], 1
    %2078 = vsyncpa [#allocation9], 1
    %2079 = vsyncpa [#allocation4], 1

</llo_original>
